<compile_context>
chip_gen: v7x
topology: tpu7x:2x2x1
jax: 0.10.0
libtpu: 0.0.40
codegen_flags: <defaults>
</compile_context>

<pallas_src>
import functools
import math

import jax
import jax.numpy as jnp
import numpy as np
from jax import lax
from jax.experimental import pallas as pl
from jax.experimental.pallas import tpu as pltpu


def _mha_kernel(q_ref, k_ref, v_ref,
                wq_ref, wk_ref, wv_ref, wo_ref,
                bq_ref, bk_ref, bv_ref, bo_ref,
                out_ref, *, num_heads, seq_len, compute_dtype):
    bt, sp, D = q_ref.shape
    dk = D // num_heads
    cd = compute_dtype

    # Flatten the batch group into the M (sublane) dimension for the
    # projections: one big (bt*sp, D) x (D, D) MXU matmul each.
    x_q = q_ref[...].reshape(bt * sp, D).astype(cd)
    x_k = k_ref[...].reshape(bt * sp, D).astype(cd)
    x_v = v_ref[...].reshape(bt * sp, D).astype(cd)

    # Weights are pre-transposed to (in, out) and pre-cast to compute_dtype;
    # the 1/sqrt(dk) scale is already folded into wq_ref / bq_ref.
    q = (jnp.dot(x_q, wq_ref[...], preferred_element_type=jnp.float32)
         + bq_ref[...]).astype(cd)
    k = (jnp.dot(x_k, wk_ref[...], preferred_element_type=jnp.float32)
         + bk_ref[...]).astype(cd)
    v = (jnp.dot(x_v, wv_ref[...], preferred_element_type=jnp.float32)
         + bv_ref[...]).astype(cd)

    # Additive bias masking the padded key columns (hoisted out of the loops).
    if seq_len < sp:
        key_bias = jnp.where(
            lax.broadcasted_iota(jnp.int32, (1, sp), 1) < seq_len,
            jnp.float32(0.0), jnp.float32(-1e9))
    else:
        key_bias = None

    # Per (batch, head) attention; heads/batches are Python ints -> static
    # unroll.  Per-head ctx tiles are concatenated in registers (no masked
    # column stores into a VMEM scratch, no reload).
    ctx_rows = []
    for b in range(bt):
        rows = slice(b * sp, (b + 1) * sp)
        head_ctx = []
        for h in range(num_heads):
            cols = slice(h * dk, (h + 1) * dk)
            qh = q[rows, cols]                      # (sp, dk)
            kh = k[rows, cols]
            vh = v[rows, cols]

            # scores = qh @ kh.T without an in-kernel transpose.
            scores = lax.dot_general(qh, kh, (((1,), (1,)), ((), ())),
                                     preferred_element_type=jnp.float32)
            if key_bias is not None:
                scores = scores + key_bias
            m = jnp.max(scores, axis=-1, keepdims=True)
            e = jnp.exp(scores - m)
            denom = jnp.sum(e, axis=-1, keepdims=True)
            attn = (e * pl.reciprocal(denom, approx=True)).astype(cd)

            head_ctx.append(jnp.dot(attn, vh,
                                    preferred_element_type=jnp.float32))
        ctx_rows.append(jnp.concatenate(head_ctx, axis=-1))    # (sp, D)
    ctx = jnp.concatenate(ctx_rows, axis=0).astype(cd)         # (bt*sp, D)

    # Single full-D output projection (compute_dtype operands, f32 acc),
    # written lane-dense.
    out = jnp.dot(ctx, wo_ref[...],
                  preferred_element_type=jnp.float32) + bo_ref[...]
    out_ref[...] = out.reshape(bt, sp, D).astype(out_ref.dtype)


def prepare_mha_params(params, num_heads, compute_dtype=jnp.bfloat16):
    """One-time host-side glue: transpose, fold scale, cast weights."""
    D = params["wq"].shape[0]
    dk = D // num_heads
    scale = 1.0 / math.sqrt(dk)
    f32 = jnp.float32
    return {
        "wq": (params["wq"] * scale).T.astype(compute_dtype),
        "wk": params["wk"].T.astype(compute_dtype),
        "wv": params["wv"].T.astype(compute_dtype),
        "wo": params["wo"].T.astype(compute_dtype),
        "bq": (params["bq"] * scale).reshape(1, D).astype(f32),
        "bk": params["bk"].reshape(1, D).astype(f32),
        "bv": params["bv"].reshape(1, D).astype(f32),
        "bo": params["bo"].reshape(1, D).astype(f32),
    }


def _pick_block_b(B, sp):
    """Largest divisor of B with block_b * sp <= ~256 (fills MXU sublanes)."""
    target = max(1, 256 // sp)
    bb = 1
    for cand in range(1, B + 1):
        if B % cand == 0 and cand <= target:
            bb = cand
    return bb


def _vmem_budget(block_b, sp, D, in_bytes, cd_bytes):
    weights = 4 * D * D * cd_bytes
    biases = 4 * 8 * max(D, 128) * 4
    io = 2 * 4 * block_b * sp * D * in_bytes          # double-buffered Q/K/V/out
    proj = 4 * block_b * sp * D * 4                   # q/k/v/ctx temporaries
    scores = 3 * sp * sp * 4                          # scores/e/attn per head
    est = 2 * (weights + biases + io + proj + scores)
    return int(min(max(est, 32 * 1024 * 1024), 64 * 1024 * 1024))


def multi_head_attention(Q, K, V, prepared, num_heads):
    B, S, D = Q.shape
    assert D % num_heads == 0
    compute_dtype = prepared["wq"].dtype
    cd_bytes = jnp.dtype(compute_dtype).itemsize
    in_bytes = jnp.dtype(Q.dtype).itemsize

    # Pad S to a sublane-friendly multiple (16 for sub-32-bit compute, else 8).
    mult = 8 if cd_bytes == 4 else 16
    sp = ((S + mult - 1) // mult) * mult
    if sp != S:
        pad = ((0, 0), (0, sp - S), (0, 0))
        Qp, Kp, Vp = jnp.pad(Q, pad), jnp.pad(K, pad), jnp.pad(V, pad)
    else:
        Qp, Kp, Vp = Q, K, V

    block_b = _pick_block_b(B, sp)
    nb = B // block_b

    kernel = functools.partial(_mha_kernel, num_heads=num_heads,
                               seq_len=S, compute_dtype=compute_dtype)

    xmap = lambda i: (i, 0, 0)        # per-batch-group (block_b, sp, D) block
    wmap = lambda i: (0, 0)           # constant -> stays VMEM-resident

    out = pl.pallas_call(
        kernel,
        out_shape=jax.ShapeDtypeStruct((B, sp, D), Q.dtype),
        grid_spec=pltpu.PrefetchScalarGridSpec(
            num_scalar_prefetch=0,
            grid=(nb,),
            in_specs=[
                pl.BlockSpec((block_b, sp, D), xmap),   # Q
                pl.BlockSpec((block_b, sp, D), xmap),   # K
                pl.BlockSpec((block_b, sp, D), xmap),   # V
                pl.BlockSpec((D, D), wmap),             # Wq^T (scaled, cd)
                pl.BlockSpec((D, D), wmap),             # Wk^T (cd)
                pl.BlockSpec((D, D), wmap),             # Wv^T (cd)
                pl.BlockSpec((D, D), wmap),             # Wo^T (cd)
                pl.BlockSpec((1, D), wmap),             # bq (scaled, f32)
                pl.BlockSpec((1, D), wmap),             # bk
                pl.BlockSpec((1, D), wmap),             # bv
                pl.BlockSpec((1, D), wmap),             # bo
            ],
            out_specs=pl.BlockSpec((block_b, sp, D), xmap),
        ),
        compiler_params=pltpu.CompilerParams(
            dimension_semantics=("parallel",),
            vmem_limit_bytes=_vmem_budget(block_b, sp, D, in_bytes, cd_bytes)),
    )(Qp, Kp, Vp,
      prepared["wq"], prepared["wk"], prepared["wv"], prepared["wo"],
      prepared["bq"], prepared["bk"], prepared["bv"], prepared["bo"])

    return out[:, :S, :] if sp != S else out


def mha_reference(Q, K, V, params, num_heads):
    B, S, D = Q.shape
    dk = D // num_heads

    def proj(x, w, b):
        y = x @ w.T + b
        return y.reshape(B, S, num_heads, dk).transpose(0, 2, 1, 3)

    q = proj(Q, params["wq"], params["bq"])
    k = proj(K, params["wk"], params["bk"])
    v = proj(V, params["wv"], params["bv"])
    scores = jnp.einsum("bhqd,bhkd->bhqk", q, k) / math.sqrt(dk)
    attn = jax.nn.softmax(scores, axis=-1)
    ctx = jnp.einsum("bhqk,bhkd->bhqd", attn, v)
    ctx = ctx.transpose(0, 2, 1, 3).reshape(B, S, D)
    return ctx @ params["wo"].T + params["bo"]


if __name__ == "__main__":
    # Small shapes consistent with the module: batch=2, seq_len=10 (as in the
    # spec; exercises the S-padding path), d_model=128, num_heads=4.
    B, S, D, H = 2, 10, 128, 4

    key = jax.random.PRNGKey(0)
    keys = jax.random.split(key, 11)
    scale = 1.0 / math.sqrt(D)
    params = {
        "wq": jax.random.normal(keys[0], (D, D), jnp.float32) * scale,
        "bq": jax.random.normal(keys[1], (D,), jnp.float32) * 0.01,
        "wk": jax.random.normal(keys[2], (D, D), jnp.float32) * scale,
        "bk": jax.random.normal(keys[3], (D,), jnp.float32) * 0.01,
        "wv": jax.random.normal(keys[4], (D, D), jnp.float32) * scale,
        "bv": jax.random.normal(keys[5], (D,), jnp.float32) * 0.01,
        "wo": jax.random.normal(keys[6], (D, D), jnp.float32) * scale,
        "bo": jax.random.normal(keys[7], (D,), jnp.float32) * 0.01,
    }
    Q = jax.random.normal(keys[8], (B, S, D), jnp.float32)
    K = jax.random.normal(keys[9], (B, S, D), jnp.float32)
    V = jax.random.normal(keys[10], (B, S, D), jnp.float32)

    ref = mha_reference(Q, K, V, params, H)

    # f32 compute path (tight check; only the approx reciprocal differs).
    prep_f32 = prepare_mha_params(params, H, compute_dtype=jnp.float32)
    out_f32 = jax.block_until_ready(multi_head_attention(Q, K, V, prep_f32, H))
    np.testing.assert_allclose(np.asarray(out_f32), np.asarray(ref),
                               rtol=5e-3, atol=5e-3)

    # bf16 compute path (projections + attention + output proj on the MXU in
    # bf16, f32 accumulation) — the recommended performance configuration.
    prep_bf16 = prepare_mha_params(params, H, compute_dtype=jnp.bfloat16)
    out_bf16 = jax.block_until_ready(multi_head_attention(Q, K, V, prep_bf16, H))
    np.testing.assert_allclose(np.asarray(out_bf16), np.asarray(ref),
                               rtol=8e-2, atol=8e-2)

    print("KERNEL_OK")
</pallas_src>

<mosaic_0001>
module attributes {stable_mosaic.version = 11 : i64} {
  func.func @_mha_kernel(%arg0: i32, %arg1: memref<2x16x128xf32, #tpu.memory_space<vmem>>, %arg2: memref<2x16x128xf32, #tpu.memory_space<vmem>>, %arg3: memref<2x16x128xf32, #tpu.memory_space<vmem>>, %arg4: memref<128x128xf32, #tpu.memory_space<vmem>>, %arg5: memref<128x128xf32, #tpu.memory_space<vmem>>, %arg6: memref<128x128xf32, #tpu.memory_space<vmem>>, %arg7: memref<128x128xf32, #tpu.memory_space<vmem>>, %arg8: memref<1x128xf32, #tpu.memory_space<vmem>>, %arg9: memref<1x128xf32, #tpu.memory_space<vmem>>, %arg10: memref<1x128xf32, #tpu.memory_space<vmem>>, %arg11: memref<1x128xf32, #tpu.memory_space<vmem>>, %arg12: memref<2x16x128xf32, #tpu.memory_space<vmem>>) attributes {dimension_semantics = [#tpu.dimension_semantics<parallel>], iteration_bounds = array<i64: 1>, scalar_prefetch = 0 : i64, scratch_operands = 0 : i64, tpu.core_type = #tpu.core_type<tc>, window_params = [{transform_indices = @transform_0, window_bounds = array<i64: 2, 16, 128>}, {transform_indices = @transform_1, window_bounds = array<i64: 2, 16, 128>}, {transform_indices = @transform_2, window_bounds = array<i64: 2, 16, 128>}, {pipeline_mode = #tpu.pipeline_mode<synchronous>, transform_indices = @transform_3, window_bounds = array<i64: 128, 128>}, {pipeline_mode = #tpu.pipeline_mode<synchronous>, transform_indices = @transform_4, window_bounds = array<i64: 128, 128>}, {pipeline_mode = #tpu.pipeline_mode<synchronous>, transform_indices = @transform_5, window_bounds = array<i64: 128, 128>}, {pipeline_mode = #tpu.pipeline_mode<synchronous>, transform_indices = @transform_6, window_bounds = array<i64: 128, 128>}, {pipeline_mode = #tpu.pipeline_mode<synchronous>, transform_indices = @transform_7, window_bounds = array<i64: 1, 128>}, {pipeline_mode = #tpu.pipeline_mode<synchronous>, transform_indices = @transform_8, window_bounds = array<i64: 1, 128>}, {pipeline_mode = #tpu.pipeline_mode<synchronous>, transform_indices = @transform_9, window_bounds = array<i64: 1, 128>}, {pipeline_mode = #tpu.pipeline_mode<synchronous>, transform_indices = @transform_10, window_bounds = array<i64: 1, 128>}, {transform_indices = @transform_11, window_bounds = array<i64: 2, 16, 128>}]} {
    %c0 = arith.constant 0 : index
    %c0_0 = arith.constant 0 : index
    %c0_1 = arith.constant 0 : index
    %0 = vector.load %arg1[%c0, %c0_0, %c0_1] : memref<2x16x128xf32, #tpu.memory_space<vmem>>, vector<2x16x128xf32>
    %1 = vector.shape_cast %0 : vector<2x16x128xf32> to vector<32x128xf32>
    %c0_2 = arith.constant 0 : index
    %c0_3 = arith.constant 0 : index
    %c0_4 = arith.constant 0 : index
    %2 = vector.load %arg2[%c0_2, %c0_3, %c0_4] : memref<2x16x128xf32, #tpu.memory_space<vmem>>, vector<2x16x128xf32>
    %3 = vector.shape_cast %2 : vector<2x16x128xf32> to vector<32x128xf32>
    %c0_5 = arith.constant 0 : index
    %c0_6 = arith.constant 0 : index
    %c0_7 = arith.constant 0 : index
    %4 = vector.load %arg3[%c0_5, %c0_6, %c0_7] : memref<2x16x128xf32, #tpu.memory_space<vmem>>, vector<2x16x128xf32>
    %5 = vector.shape_cast %4 : vector<2x16x128xf32> to vector<32x128xf32>
    %c0_8 = arith.constant 0 : index
    %c0_9 = arith.constant 0 : index
    %6 = vector.load %arg4[%c0_8, %c0_9] : memref<128x128xf32, #tpu.memory_space<vmem>>, vector<128x128xf32>
    %cst = arith.constant dense<0.000000e+00> : vector<32x128xf32>
    %7 = tpu.matmul %1, %6, %cst {dimension_numbers = #tpu.dot_dimension_numbers<[1], [0], [0], [1], [0, 0, 1, 1], [], []>} : vector<32x128xf32>, vector<128x128xf32>, vector<32x128xf32> -> vector<32x128xf32>
    %c0_10 = arith.constant 0 : index
    %c0_11 = arith.constant 0 : index
    %8 = vector.load %arg8[%c0_10, %c0_11] : memref<1x128xf32, #tpu.memory_space<vmem>>, vector<1x128xf32>
    %9 = vector.broadcast %8 : vector<1x128xf32> to vector<32x128xf32>
    %10 = arith.addf %7, %9 : vector<32x128xf32>
    %c0_12 = arith.constant 0 : index
    %c0_13 = arith.constant 0 : index
    %11 = vector.load %arg5[%c0_12, %c0_13] : memref<128x128xf32, #tpu.memory_space<vmem>>, vector<128x128xf32>
    %cst_14 = arith.constant dense<0.000000e+00> : vector<32x128xf32>
    %12 = tpu.matmul %3, %11, %cst_14 {dimension_numbers = #tpu.dot_dimension_numbers<[1], [0], [0], [1], [0, 0, 1, 1], [], []>} : vector<32x128xf32>, vector<128x128xf32>, vector<32x128xf32> -> vector<32x128xf32>
    %c0_15 = arith.constant 0 : index
    %c0_16 = arith.constant 0 : index
    %13 = vector.load %arg9[%c0_15, %c0_16] : memref<1x128xf32, #tpu.memory_space<vmem>>, vector<1x128xf32>
    %14 = vector.broadcast %13 : vector<1x128xf32> to vector<32x128xf32>
    %15 = arith.addf %12, %14 : vector<32x128xf32>
    %c0_17 = arith.constant 0 : index
    %c0_18 = arith.constant 0 : index
    %16 = vector.load %arg6[%c0_17, %c0_18] : memref<128x128xf32, #tpu.memory_space<vmem>>, vector<128x128xf32>
    %cst_19 = arith.constant dense<0.000000e+00> : vector<32x128xf32>
    %17 = tpu.matmul %5, %16, %cst_19 {dimension_numbers = #tpu.dot_dimension_numbers<[1], [0], [0], [1], [0, 0, 1, 1], [], []>} : vector<32x128xf32>, vector<128x128xf32>, vector<32x128xf32> -> vector<32x128xf32>
    %c0_20 = arith.constant 0 : index
    %c0_21 = arith.constant 0 : index
    %18 = vector.load %arg10[%c0_20, %c0_21] : memref<1x128xf32, #tpu.memory_space<vmem>>, vector<1x128xf32>
    %19 = vector.broadcast %18 : vector<1x128xf32> to vector<32x128xf32>
    %20 = arith.addf %17, %19 : vector<32x128xf32>
    %21 = tpu.iota {dimensions = array<i32: 1>} : vector<1x16xi32>
    %c10_i32 = arith.constant 10 : i32
    %22 = vector.broadcast %c10_i32 : i32 to vector<1x16xi32>
    %23 = arith.cmpi slt, %21, %22 : vector<1x16xi32>
    %cst_22 = arith.constant 0.000000e+00 : f32
    %cst_23 = arith.constant -1.000000e+09 : f32
    %24 = vector.broadcast %cst_22 : f32 to vector<1x16xf32>
    %25 = vector.broadcast %cst_23 : f32 to vector<1x16xf32>
    %26 = arith.select %23, %24, %25 : vector<1x16xi1>, vector<1x16xf32>
    %27 = vector.extract_strided_slice %10 {offsets = [0, 0], sizes = [16, 32], strides = [1, 1]} : vector<32x128xf32> to vector<16x32xf32>
    %28 = vector.extract_strided_slice %15 {offsets = [0, 0], sizes = [16, 32], strides = [1, 1]} : vector<32x128xf32> to vector<16x32xf32>
    %29 = vector.extract_strided_slice %20 {offsets = [0, 0], sizes = [16, 32], strides = [1, 1]} : vector<32x128xf32> to vector<16x32xf32>
    %cst_24 = arith.constant dense<0.000000e+00> : vector<16x16xf32>
    %30 = tpu.matmul %27, %28, %cst_24 {dimension_numbers = #tpu.dot_dimension_numbers<[1], [1], [0], [0], [0, 0, 1, 0], [], []>} : vector<16x32xf32>, vector<16x32xf32>, vector<16x16xf32> -> vector<16x16xf32>
    %31 = vector.broadcast %26 : vector<1x16xf32> to vector<16x16xf32>
    %32 = arith.addf %30, %31 : vector<16x16xf32>
    %cst_25 = arith.constant dense<0xFF800000> : vector<16xf32>
    %33 = vector.multi_reduction <maximumf>, %32, %cst_25 [1] : vector<16x16xf32> to vector<16xf32>
    %34 = vector.shape_cast %33 : vector<16xf32> to vector<16x1xf32>
    %35 = vector.broadcast %34 : vector<16x1xf32> to vector<16x16xf32>
    %36 = arith.subf %32, %35 : vector<16x16xf32>
    %37 = math.exp %36 : vector<16x16xf32>
    %cst_26 = arith.constant dense<0.000000e+00> : vector<16xf32>
    %38 = vector.multi_reduction <add>, %37, %cst_26 [1] : vector<16x16xf32> to vector<16xf32>
    %39 = vector.shape_cast %38 : vector<16xf32> to vector<16x1xf32>
    %40 = tpu.reciprocal %39 {approx = true} : vector<16x1xf32> -> vector<16x1xf32>
    %41 = vector.broadcast %40 : vector<16x1xf32> to vector<16x16xf32>
    %42 = arith.mulf %37, %41 : vector<16x16xf32>
    %cst_27 = arith.constant dense<0.000000e+00> : vector<16x32xf32>
    %43 = tpu.matmul %42, %29, %cst_27 {dimension_numbers = #tpu.dot_dimension_numbers<[1], [0], [0], [1], [0, 0, 1, 1], [], []>} : vector<16x16xf32>, vector<16x32xf32>, vector<16x32xf32> -> vector<16x32xf32>
    %44 = vector.extract_strided_slice %10 {offsets = [0, 32], sizes = [16, 32], strides = [1, 1]} : vector<32x128xf32> to vector<16x32xf32>
    %45 = vector.extract_strided_slice %15 {offsets = [0, 32], sizes = [16, 32], strides = [1, 1]} : vector<32x128xf32> to vector<16x32xf32>
    %46 = vector.extract_strided_slice %20 {offsets = [0, 32], sizes = [16, 32], strides = [1, 1]} : vector<32x128xf32> to vector<16x32xf32>
    %cst_28 = arith.constant dense<0.000000e+00> : vector<16x16xf32>
    %47 = tpu.matmul %44, %45, %cst_28 {dimension_numbers = #tpu.dot_dimension_numbers<[1], [1], [0], [0], [0, 0, 1, 0], [], []>} : vector<16x32xf32>, vector<16x32xf32>, vector<16x16xf32> -> vector<16x16xf32>
    %48 = vector.broadcast %26 : vector<1x16xf32> to vector<16x16xf32>
    %49 = arith.addf %47, %48 : vector<16x16xf32>
    %cst_29 = arith.constant dense<0xFF800000> : vector<16xf32>
    %50 = vector.multi_reduction <maximumf>, %49, %cst_29 [1] : vector<16x16xf32> to vector<16xf32>
    %51 = vector.shape_cast %50 : vector<16xf32> to vector<16x1xf32>
    %52 = vector.broadcast %51 : vector<16x1xf32> to vector<16x16xf32>
    %53 = arith.subf %49, %52 : vector<16x16xf32>
    %54 = math.exp %53 : vector<16x16xf32>
    %cst_30 = arith.constant dense<0.000000e+00> : vector<16xf32>
    %55 = vector.multi_reduction <add>, %54, %cst_30 [1] : vector<16x16xf32> to vector<16xf32>
    %56 = vector.shape_cast %55 : vector<16xf32> to vector<16x1xf32>
    %57 = tpu.reciprocal %56 {approx = true} : vector<16x1xf32> -> vector<16x1xf32>
    %58 = vector.broadcast %57 : vector<16x1xf32> to vector<16x16xf32>
    %59 = arith.mulf %54, %58 : vector<16x16xf32>
    %cst_31 = arith.constant dense<0.000000e+00> : vector<16x32xf32>
    %60 = tpu.matmul %59, %46, %cst_31 {dimension_numbers = #tpu.dot_dimension_numbers<[1], [0], [0], [1], [0, 0, 1, 1], [], []>} : vector<16x16xf32>, vector<16x32xf32>, vector<16x32xf32> -> vector<16x32xf32>
    %61 = vector.extract_strided_slice %10 {offsets = [0, 64], sizes = [16, 32], strides = [1, 1]} : vector<32x128xf32> to vector<16x32xf32>
    %62 = vector.extract_strided_slice %15 {offsets = [0, 64], sizes = [16, 32], strides = [1, 1]} : vector<32x128xf32> to vector<16x32xf32>
    %63 = vector.extract_strided_slice %20 {offsets = [0, 64], sizes = [16, 32], strides = [1, 1]} : vector<32x128xf32> to vector<16x32xf32>
    %cst_32 = arith.constant dense<0.000000e+00> : vector<16x16xf32>
    %64 = tpu.matmul %61, %62, %cst_32 {dimension_numbers = #tpu.dot_dimension_numbers<[1], [1], [0], [0], [0, 0, 1, 0], [], []>} : vector<16x32xf32>, vector<16x32xf32>, vector<16x16xf32> -> vector<16x16xf32>
    %65 = vector.broadcast %26 : vector<1x16xf32> to vector<16x16xf32>
    %66 = arith.addf %64, %65 : vector<16x16xf32>
    %cst_33 = arith.constant dense<0xFF800000> : vector<16xf32>
    %67 = vector.multi_reduction <maximumf>, %66, %cst_33 [1] : vector<16x16xf32> to vector<16xf32>
    %68 = vector.shape_cast %67 : vector<16xf32> to vector<16x1xf32>
    %69 = vector.broadcast %68 : vector<16x1xf32> to vector<16x16xf32>
    %70 = arith.subf %66, %69 : vector<16x16xf32>
    %71 = math.exp %70 : vector<16x16xf32>
    %cst_34 = arith.constant dense<0.000000e+00> : vector<16xf32>
    %72 = vector.multi_reduction <add>, %71, %cst_34 [1] : vector<16x16xf32> to vector<16xf32>
    %73 = vector.shape_cast %72 : vector<16xf32> to vector<16x1xf32>
    %74 = tpu.reciprocal %73 {approx = true} : vector<16x1xf32> -> vector<16x1xf32>
    %75 = vector.broadcast %74 : vector<16x1xf32> to vector<16x16xf32>
    %76 = arith.mulf %71, %75 : vector<16x16xf32>
    %cst_35 = arith.constant dense<0.000000e+00> : vector<16x32xf32>
    %77 = tpu.matmul %76, %63, %cst_35 {dimension_numbers = #tpu.dot_dimension_numbers<[1], [0], [0], [1], [0, 0, 1, 1], [], []>} : vector<16x16xf32>, vector<16x32xf32>, vector<16x32xf32> -> vector<16x32xf32>
    %78 = vector.extract_strided_slice %10 {offsets = [0, 96], sizes = [16, 32], strides = [1, 1]} : vector<32x128xf32> to vector<16x32xf32>
    %79 = vector.extract_strided_slice %15 {offsets = [0, 96], sizes = [16, 32], strides = [1, 1]} : vector<32x128xf32> to vector<16x32xf32>
    %80 = vector.extract_strided_slice %20 {offsets = [0, 96], sizes = [16, 32], strides = [1, 1]} : vector<32x128xf32> to vector<16x32xf32>
    %cst_36 = arith.constant dense<0.000000e+00> : vector<16x16xf32>
    %81 = tpu.matmul %78, %79, %cst_36 {dimension_numbers = #tpu.dot_dimension_numbers<[1], [1], [0], [0], [0, 0, 1, 0], [], []>} : vector<16x32xf32>, vector<16x32xf32>, vector<16x16xf32> -> vector<16x16xf32>
    %82 = vector.broadcast %26 : vector<1x16xf32> to vector<16x16xf32>
    %83 = arith.addf %81, %82 : vector<16x16xf32>
    %cst_37 = arith.constant dense<0xFF800000> : vector<16xf32>
    %84 = vector.multi_reduction <maximumf>, %83, %cst_37 [1] : vector<16x16xf32> to vector<16xf32>
    %85 = vector.shape_cast %84 : vector<16xf32> to vector<16x1xf32>
    %86 = vector.broadcast %85 : vector<16x1xf32> to vector<16x16xf32>
    %87 = arith.subf %83, %86 : vector<16x16xf32>
    %88 = math.exp %87 : vector<16x16xf32>
    %cst_38 = arith.constant dense<0.000000e+00> : vector<16xf32>
    %89 = vector.multi_reduction <add>, %88, %cst_38 [1] : vector<16x16xf32> to vector<16xf32>
    %90 = vector.shape_cast %89 : vector<16xf32> to vector<16x1xf32>
    %91 = tpu.reciprocal %90 {approx = true} : vector<16x1xf32> -> vector<16x1xf32>
    %92 = vector.broadcast %91 : vector<16x1xf32> to vector<16x16xf32>
    %93 = arith.mulf %88, %92 : vector<16x16xf32>
    %cst_39 = arith.constant dense<0.000000e+00> : vector<16x32xf32>
    %94 = tpu.matmul %93, %80, %cst_39 {dimension_numbers = #tpu.dot_dimension_numbers<[1], [0], [0], [1], [0, 0, 1, 1], [], []>} : vector<16x16xf32>, vector<16x32xf32>, vector<16x32xf32> -> vector<16x32xf32>
    %95 = tpu.concatenate %43, %60, %77, %94 in 1 : vector<16x32xf32>, vector<16x32xf32>, vector<16x32xf32>, vector<16x32xf32> -> vector<16x128xf32>
    %96 = vector.extract_strided_slice %10 {offsets = [16, 0], sizes = [16, 32], strides = [1, 1]} : vector<32x128xf32> to vector<16x32xf32>
    %97 = vector.extract_strided_slice %15 {offsets = [16, 0], sizes = [16, 32], strides = [1, 1]} : vector<32x128xf32> to vector<16x32xf32>
    %98 = vector.extract_strided_slice %20 {offsets = [16, 0], sizes = [16, 32], strides = [1, 1]} : vector<32x128xf32> to vector<16x32xf32>
    %cst_40 = arith.constant dense<0.000000e+00> : vector<16x16xf32>
    %99 = tpu.matmul %96, %97, %cst_40 {dimension_numbers = #tpu.dot_dimension_numbers<[1], [1], [0], [0], [0, 0, 1, 0], [], []>} : vector<16x32xf32>, vector<16x32xf32>, vector<16x16xf32> -> vector<16x16xf32>
    %100 = vector.broadcast %26 : vector<1x16xf32> to vector<16x16xf32>
    %101 = arith.addf %99, %100 : vector<16x16xf32>
    %cst_41 = arith.constant dense<0xFF800000> : vector<16xf32>
    %102 = vector.multi_reduction <maximumf>, %101, %cst_41 [1] : vector<16x16xf32> to vector<16xf32>
    %103 = vector.shape_cast %102 : vector<16xf32> to vector<16x1xf32>
    %104 = vector.broadcast %103 : vector<16x1xf32> to vector<16x16xf32>
    %105 = arith.subf %101, %104 : vector<16x16xf32>
    %106 = math.exp %105 : vector<16x16xf32>
    %cst_42 = arith.constant dense<0.000000e+00> : vector<16xf32>
    %107 = vector.multi_reduction <add>, %106, %cst_42 [1] : vector<16x16xf32> to vector<16xf32>
    %108 = vector.shape_cast %107 : vector<16xf32> to vector<16x1xf32>
    %109 = tpu.reciprocal %108 {approx = true} : vector<16x1xf32> -> vector<16x1xf32>
    %110 = vector.broadcast %109 : vector<16x1xf32> to vector<16x16xf32>
    %111 = arith.mulf %106, %110 : vector<16x16xf32>
    %cst_43 = arith.constant dense<0.000000e+00> : vector<16x32xf32>
    %112 = tpu.matmul %111, %98, %cst_43 {dimension_numbers = #tpu.dot_dimension_numbers<[1], [0], [0], [1], [0, 0, 1, 1], [], []>} : vector<16x16xf32>, vector<16x32xf32>, vector<16x32xf32> -> vector<16x32xf32>
    %113 = vector.extract_strided_slice %10 {offsets = [16, 32], sizes = [16, 32], strides = [1, 1]} : vector<32x128xf32> to vector<16x32xf32>
    %114 = vector.extract_strided_slice %15 {offsets = [16, 32], sizes = [16, 32], strides = [1, 1]} : vector<32x128xf32> to vector<16x32xf32>
    %115 = vector.extract_strided_slice %20 {offsets = [16, 32], sizes = [16, 32], strides = [1, 1]} : vector<32x128xf32> to vector<16x32xf32>
    %cst_44 = arith.constant dense<0.000000e+00> : vector<16x16xf32>
    %116 = tpu.matmul %113, %114, %cst_44 {dimension_numbers = #tpu.dot_dimension_numbers<[1], [1], [0], [0], [0, 0, 1, 0], [], []>} : vector<16x32xf32>, vector<16x32xf32>, vector<16x16xf32> -> vector<16x16xf32>
    %117 = vector.broadcast %26 : vector<1x16xf32> to vector<16x16xf32>
    %118 = arith.addf %116, %117 : vector<16x16xf32>
    %cst_45 = arith.constant dense<0xFF800000> : vector<16xf32>
    %119 = vector.multi_reduction <maximumf>, %118, %cst_45 [1] : vector<16x16xf32> to vector<16xf32>
    %120 = vector.shape_cast %119 : vector<16xf32> to vector<16x1xf32>
    %121 = vector.broadcast %120 : vector<16x1xf32> to vector<16x16xf32>
    %122 = arith.subf %118, %121 : vector<16x16xf32>
    %123 = math.exp %122 : vector<16x16xf32>
    %cst_46 = arith.constant dense<0.000000e+00> : vector<16xf32>
    %124 = vector.multi_reduction <add>, %123, %cst_46 [1] : vector<16x16xf32> to vector<16xf32>
    %125 = vector.shape_cast %124 : vector<16xf32> to vector<16x1xf32>
    %126 = tpu.reciprocal %125 {approx = true} : vector<16x1xf32> -> vector<16x1xf32>
    %127 = vector.broadcast %126 : vector<16x1xf32> to vector<16x16xf32>
    %128 = arith.mulf %123, %127 : vector<16x16xf32>
    %cst_47 = arith.constant dense<0.000000e+00> : vector<16x32xf32>
    %129 = tpu.matmul %128, %115, %cst_47 {dimension_numbers = #tpu.dot_dimension_numbers<[1], [0], [0], [1], [0, 0, 1, 1], [], []>} : vector<16x16xf32>, vector<16x32xf32>, vector<16x32xf32> -> vector<16x32xf32>
    %130 = vector.extract_strided_slice %10 {offsets = [16, 64], sizes = [16, 32], strides = [1, 1]} : vector<32x128xf32> to vector<16x32xf32>
    %131 = vector.extract_strided_slice %15 {offsets = [16, 64], sizes = [16, 32], strides = [1, 1]} : vector<32x128xf32> to vector<16x32xf32>
    %132 = vector.extract_strided_slice %20 {offsets = [16, 64], sizes = [16, 32], strides = [1, 1]} : vector<32x128xf32> to vector<16x32xf32>
    %cst_48 = arith.constant dense<0.000000e+00> : vector<16x16xf32>
    %133 = tpu.matmul %130, %131, %cst_48 {dimension_numbers = #tpu.dot_dimension_numbers<[1], [1], [0], [0], [0, 0, 1, 0], [], []>} : vector<16x32xf32>, vector<16x32xf32>, vector<16x16xf32> -> vector<16x16xf32>
    %134 = vector.broadcast %26 : vector<1x16xf32> to vector<16x16xf32>
    %135 = arith.addf %133, %134 : vector<16x16xf32>
    %cst_49 = arith.constant dense<0xFF800000> : vector<16xf32>
    %136 = vector.multi_reduction <maximumf>, %135, %cst_49 [1] : vector<16x16xf32> to vector<16xf32>
    %137 = vector.shape_cast %136 : vector<16xf32> to vector<16x1xf32>
    %138 = vector.broadcast %137 : vector<16x1xf32> to vector<16x16xf32>
    %139 = arith.subf %135, %138 : vector<16x16xf32>
    %140 = math.exp %139 : vector<16x16xf32>
    %cst_50 = arith.constant dense<0.000000e+00> : vector<16xf32>
    %141 = vector.multi_reduction <add>, %140, %cst_50 [1] : vector<16x16xf32> to vector<16xf32>
    %142 = vector.shape_cast %141 : vector<16xf32> to vector<16x1xf32>
    %143 = tpu.reciprocal %142 {approx = true} : vector<16x1xf32> -> vector<16x1xf32>
    %144 = vector.broadcast %143 : vector<16x1xf32> to vector<16x16xf32>
    %145 = arith.mulf %140, %144 : vector<16x16xf32>
    %cst_51 = arith.constant dense<0.000000e+00> : vector<16x32xf32>
    %146 = tpu.matmul %145, %132, %cst_51 {dimension_numbers = #tpu.dot_dimension_numbers<[1], [0], [0], [1], [0, 0, 1, 1], [], []>} : vector<16x16xf32>, vector<16x32xf32>, vector<16x32xf32> -> vector<16x32xf32>
    %147 = vector.extract_strided_slice %10 {offsets = [16, 96], sizes = [16, 32], strides = [1, 1]} : vector<32x128xf32> to vector<16x32xf32>
    %148 = vector.extract_strided_slice %15 {offsets = [16, 96], sizes = [16, 32], strides = [1, 1]} : vector<32x128xf32> to vector<16x32xf32>
    %149 = vector.extract_strided_slice %20 {offsets = [16, 96], sizes = [16, 32], strides = [1, 1]} : vector<32x128xf32> to vector<16x32xf32>
    %cst_52 = arith.constant dense<0.000000e+00> : vector<16x16xf32>
    %150 = tpu.matmul %147, %148, %cst_52 {dimension_numbers = #tpu.dot_dimension_numbers<[1], [1], [0], [0], [0, 0, 1, 0], [], []>} : vector<16x32xf32>, vector<16x32xf32>, vector<16x16xf32> -> vector<16x16xf32>
    %151 = vector.broadcast %26 : vector<1x16xf32> to vector<16x16xf32>
    %152 = arith.addf %150, %151 : vector<16x16xf32>
    %cst_53 = arith.constant dense<0xFF800000> : vector<16xf32>
    %153 = vector.multi_reduction <maximumf>, %152, %cst_53 [1] : vector<16x16xf32> to vector<16xf32>
    %154 = vector.shape_cast %153 : vector<16xf32> to vector<16x1xf32>
    %155 = vector.broadcast %154 : vector<16x1xf32> to vector<16x16xf32>
    %156 = arith.subf %152, %155 : vector<16x16xf32>
    %157 = math.exp %156 : vector<16x16xf32>
    %cst_54 = arith.constant dense<0.000000e+00> : vector<16xf32>
    %158 = vector.multi_reduction <add>, %157, %cst_54 [1] : vector<16x16xf32> to vector<16xf32>
    %159 = vector.shape_cast %158 : vector<16xf32> to vector<16x1xf32>
    %160 = tpu.reciprocal %159 {approx = true} : vector<16x1xf32> -> vector<16x1xf32>
    %161 = vector.broadcast %160 : vector<16x1xf32> to vector<16x16xf32>
    %162 = arith.mulf %157, %161 : vector<16x16xf32>
    %cst_55 = arith.constant dense<0.000000e+00> : vector<16x32xf32>
    %163 = tpu.matmul %162, %149, %cst_55 {dimension_numbers = #tpu.dot_dimension_numbers<[1], [0], [0], [1], [0, 0, 1, 1], [], []>} : vector<16x16xf32>, vector<16x32xf32>, vector<16x32xf32> -> vector<16x32xf32>
    %164 = tpu.concatenate %112, %129, %146, %163 in 1 : vector<16x32xf32>, vector<16x32xf32>, vector<16x32xf32>, vector<16x32xf32> -> vector<16x128xf32>
    %165 = tpu.concatenate %95, %164 in 0 : vector<16x128xf32>, vector<16x128xf32> -> vector<32x128xf32>
    %c0_56 = arith.constant 0 : index
    %c0_57 = arith.constant 0 : index
    %166 = vector.load %arg7[%c0_56, %c0_57] : memref<128x128xf32, #tpu.memory_space<vmem>>, vector<128x128xf32>
    %cst_58 = arith.constant dense<0.000000e+00> : vector<32x128xf32>
    %167 = tpu.matmul %165, %166, %cst_58 {dimension_numbers = #tpu.dot_dimension_numbers<[1], [0], [0], [1], [0, 0, 1, 1], [], []>} : vector<32x128xf32>, vector<128x128xf32>, vector<32x128xf32> -> vector<32x128xf32>
    %c0_59 = arith.constant 0 : index
    %c0_60 = arith.constant 0 : index
    %168 = vector.load %arg11[%c0_59, %c0_60] : memref<1x128xf32, #tpu.memory_space<vmem>>, vector<1x128xf32>
    %169 = vector.broadcast %168 : vector<1x128xf32> to vector<32x128xf32>
    %170 = arith.addf %167, %169 : vector<32x128xf32>
    %171 = vector.shape_cast %170 : vector<32x128xf32> to vector<2x16x128xf32>
    %c0_61 = arith.constant 0 : index
    %c0_62 = arith.constant 0 : index
    %c0_63 = arith.constant 0 : index
    %172 = vector.load %arg12[%c0_61, %c0_62, %c0_63] : memref<2x16x128xf32, #tpu.memory_space<vmem>>, vector<2x16x128xf32>
    tpu.vector_store %arg12[%c0_61, %c0_62, %c0_63], %171 {strides = array<i32>} : memref<2x16x128xf32, #tpu.memory_space<vmem>>, vector<2x16x128xf32>,
    return
  }
  func.func @transform_0(%arg0: i32) -> (i32, i32, i32) {
    %c0_i32 = arith.constant 0 : i32
    %c0_i32_0 = arith.constant 0 : i32
    %c0_i32_1 = arith.constant 0 : i32
    return %arg0, %c0_i32, %c0_i32_0 : i32, i32, i32
  }
  func.func @transform_1(%arg0: i32) -> (i32, i32, i32) {
    %c0_i32 = arith.constant 0 : i32
    %c0_i32_0 = arith.constant 0 : i32
    %c0_i32_1 = arith.constant 0 : i32
    return %arg0, %c0_i32, %c0_i32_0 : i32, i32, i32
  }
  func.func @transform_2(%arg0: i32) -> (i32, i32, i32) {
    %c0_i32 = arith.constant 0 : i32
    %c0_i32_0 = arith.constant 0 : i32
    %c0_i32_1 = arith.constant 0 : i32
    return %arg0, %c0_i32, %c0_i32_0 : i32, i32, i32
  }
  func.func @transform_3(%arg0: i32) -> (i32, i32) {
    %c0_i32 = arith.constant 0 : i32
    %c0_i32_0 = arith.constant 0 : i32
    %c0_i32_1 = arith.constant 0 : i32
    return %c0_i32, %c0_i32_0 : i32, i32
  }
  func.func @transform_4(%arg0: i32) -> (i32, i32) {
    %c0_i32 = arith.constant 0 : i32
    %c0_i32_0 = arith.constant 0 : i32
    %c0_i32_1 = arith.constant 0 : i32
    return %c0_i32, %c0_i32_0 : i32, i32
  }
  func.func @transform_5(%arg0: i32) -> (i32, i32) {
    %c0_i32 = arith.constant 0 : i32
    %c0_i32_0 = arith.constant 0 : i32
    %c0_i32_1 = arith.constant 0 : i32
    return %c0_i32, %c0_i32_0 : i32, i32
  }
  func.func @transform_6(%arg0: i32) -> (i32, i32) {
    %c0_i32 = arith.constant 0 : i32
    %c0_i32_0 = arith.constant 0 : i32
    %c0_i32_1 = arith.constant 0 : i32
    return %c0_i32, %c0_i32_0 : i32, i32
  }
  func.func @transform_7(%arg0: i32) -> (i32, i32) {
    %c0_i32 = arith.constant 0 : i32
    %c0_i32_0 = arith.constant 0 : i32
    %c0_i32_1 = arith.constant 0 : i32
    return %c0_i32, %c0_i32_0 : i32, i32
  }
  func.func @transform_8(%arg0: i32) -> (i32, i32) {
    %c0_i32 = arith.constant 0 : i32
    %c0_i32_0 = arith.constant 0 : i32
    %c0_i32_1 = arith.constant 0 : i32
    return %c0_i32, %c0_i32_0 : i32, i32
  }
  func.func @transform_9(%arg0: i32) -> (i32, i32) {
    %c0_i32 = arith.constant 0 : i32
    %c0_i32_0 = arith.constant 0 : i32
    %c0_i32_1 = arith.constant 0 : i32
    return %c0_i32, %c0_i32_0 : i32, i32
  }
  func.func @transform_10(%arg0: i32) -> (i32, i32) {
    %c0_i32 = arith.constant 0 : i32
    %c0_i32_0 = arith.constant 0 : i32
    %c0_i32_1 = arith.constant 0 : i32
    return %c0_i32, %c0_i32_0 : i32, i32
  }
  func.func @transform_11(%arg0: i32) -> (i32, i32, i32) {
    %c0_i32 = arith.constant 0 : i32
    %c0_i32_0 = arith.constant 0 : i32
    %c0_i32_1 = arith.constant 0 : i32
    return %arg0, %c0_i32, %c0_i32_0 : i32, i32, i32
  }
}

</mosaic_0001>

<llo_original>
// kernel: tpu_custom_call.1
$region0: #{tpu_custom_call.1}
  #allocation0 [shape = 'u32[]', space=smem, size = 0x4, offset = 0x4, fixed_abs, tag = 'smem constant byte address 0x4 - core index']
  #allocation1 [shape = 'u32[144,128]{1,0:T(1,128)}', space=vmem, size = 0x12000, scoped, tag = 'internal scratch']
  %s0 = inlined_call_operand.hbm [shape: f32[2,16,128], index: 0, kind: input, shape index: {}]
  %s1 = inlined_call_operand.hbm [shape: f32[2,16,128], index: 1, kind: input, shape index: {}]
  %s2 = inlined_call_operand.hbm [shape: f32[2,16,128], index: 2, kind: input, shape index: {}]
  %s3 = inlined_call_operand.hbm [shape: f32[128,128], index: 3, kind: input, shape index: {}]
  %s4 = inlined_call_operand.hbm [shape: f32[128,128], index: 4, kind: input, shape index: {}]
  %s5 = inlined_call_operand.hbm [shape: f32[128,128], index: 5, kind: input, shape index: {}]
  %s6 = inlined_call_operand.hbm [shape: f32[128,128], index: 6, kind: input, shape index: {}]
  %s7 = inlined_call_operand.vmem [shape: f32[1,128], index: 7, kind: input, shape index: {}]
  %s8 = inlined_call_operand.vmem [shape: f32[1,128], index: 8, kind: input, shape index: {}]
  %s9 = inlined_call_operand.vmem [shape: f32[1,128], index: 9, kind: input, shape index: {}]
  %s10 = inlined_call_operand.vmem [shape: f32[1,128], index: 10, kind: input, shape index: {}]
  %s11 = inlined_call_operand.hbm [shape: f32[2,16,128], index: 11, kind: output, shape index: {}]
  %s12 = sld [smem:[#allocation0]]
  $region82: #{tpu_custom_call.1} parent=0
    _
  %s14 = ssub.s32 1, %s12
  %s15 = scalar_select 0, %s14, %s12
  $region1: #{tpu_custom_call.1} parent=0
    #allocation2 [shape = 'u8[16384]{0}', space=vmem, size = 0x4000, scoped, tag = 'input window, operand 0, single buffered']
    #allocation3 [shape = 's32[1]{0}', space=sflag, size = 0x4, scoped, tag = 'scoped memory for tpu_custom_call.1']
    #allocation4 [shape = 's32[1]{0}', space=sflag, size = 0x4, scoped, tag = 'scoped memory for tpu_custom_call.1']
    #allocation5 [shape = 'u8[16384]{0}', space=vmem, size = 0x4000, scoped, tag = 'input window, operand 1, single buffered']
    #allocation6 [shape = 's32[1]{0}', space=sflag, size = 0x4, scoped, tag = 'scoped memory for tpu_custom_call.1']
    #allocation7 [shape = 'u8[16384]{0}', space=vmem, size = 0x4000, scoped, tag = 'input window, operand 2, single buffered']
    #allocation8 [shape = 'u8[65536]{0}', space=vmem, size = 0x10000, scoped, tag = 'input window, operand 3, single buffered']
    #allocation9 [shape = 's32[1]{0}', space=sflag, size = 0x4, scoped, tag = 'scoped memory for tpu_custom_call.1']
    #allocation10 [shape = 'u8[65536]{0}', space=vmem, size = 0x10000, scoped, tag = 'input window, operand 4, single buffered']
    #allocation11 [shape = 'u8[65536]{0}', space=vmem, size = 0x10000, scoped, tag = 'input window, operand 5, single buffered']
    #allocation12 [shape = 's32[1]{0}', space=sflag, size = 0x4, scoped, tag = 'scoped memory for tpu_custom_call.1']
    #allocation13 [shape = 'u8[65536]{0}', space=vmem, size = 0x10000, scoped, tag = 'input window, operand 6, single buffered']
    #allocation14 [shape = 'u8[16384]{0}', space=vmem, size = 0x4000, scoped, tag = 'output window, operand 0, single buffered']
    %16 = vsyncpa [#allocation3], 0
    %17 = vsyncpa [#allocation6], 0
    %18 = vsyncpa [#allocation9], 0
    %19 = vsyncpa [#allocation12], 0
    %20 = vsyncpa [#allocation4], 0
    // Predicated region
    $region2: #{tpu_custom_call.1} parent=1 // pred_check
      _
    $region3: #{tpu_custom_call.1} parent=1 // pred_check_branch
      %22 = sbr.rel (0) target = $region5
    $region4: #{tpu_custom_call.1} parent=1 // pred_region
      %s24 = ssub.s32 512, 512
      %25 = vsyncadd [#allocation3], %s24
      %s26 = sshll.u32 [#allocation2], 4
      %s27 = int_to_ptr.vmem [resolvable:$true] %s26
      %32 = dma.hbm_to_vmem [thread:$0]  %s0, 512, %s27, [#allocation3], 128, 128, 8
    $region5: #{tpu_custom_call.1} parent=1 // pred_fallthru
      _
    // Predicated region
    $region6: #{tpu_custom_call.1} parent=1 // pred_check
      _
    $region7: #{tpu_custom_call.1} parent=1 // pred_check_branch
      %34 = sbr.rel (0) target = $region9
    $region8: #{tpu_custom_call.1} parent=1 // pred_region
      %s36 = ssub.s32 512, 512
      %37 = vsyncadd [#allocation6], %s36
      %s38 = sshll.u32 [#allocation5], 4
      %s39 = int_to_ptr.vmem [resolvable:$true] %s38
      %44 = dma.hbm_to_vmem [thread:$0]  %s1, 512, %s39, [#allocation6], 128, 128, 8
    $region9: #{tpu_custom_call.1} parent=1 // pred_fallthru
      _
    // Predicated region
    $region10: #{tpu_custom_call.1} parent=1 // pred_check
      _
    $region11: #{tpu_custom_call.1} parent=1 // pred_check_branch
      %46 = sbr.rel (0) target = $region13
    $region12: #{tpu_custom_call.1} parent=1 // pred_region
      %s48 = ssub.s32 512, 512
      %49 = vsyncadd [#allocation6], %s48
      %s50 = sshll.u32 [#allocation7], 4
      %s51 = int_to_ptr.vmem [resolvable:$true] %s50
      %56 = dma.hbm_to_vmem [thread:$0]  %s2, 512, %s51, [#allocation6], 128, 128, 8
    $region13: #{tpu_custom_call.1} parent=1 // pred_fallthru
      _
    // Predicated region
    $region14: #{tpu_custom_call.1} parent=1 // pred_check
      _
    $region15: #{tpu_custom_call.1} parent=1 // pred_check_branch
      %58 = sbr.rel (0) target = $region17
    $region16: #{tpu_custom_call.1} parent=1 // pred_region
      %s60 = ssub.s32 2048, 2048
      %61 = vsyncadd [#allocation9], %s60
      %s62 = sshll.u32 [#allocation8], 4
      %s63 = int_to_ptr.vmem [resolvable:$true] %s62
      %68 = dma.hbm_to_vmem [thread:$0]  %s3, 2048, %s63, [#allocation9], 128, 128, 8
    $region17: #{tpu_custom_call.1} parent=1 // pred_fallthru
      _
    // Predicated region
    $region18: #{tpu_custom_call.1} parent=1 // pred_check
      _
    $region19: #{tpu_custom_call.1} parent=1 // pred_check_branch
      %70 = sbr.rel (0) target = $region21
    $region20: #{tpu_custom_call.1} parent=1 // pred_region
      %s72 = ssub.s32 2048, 2048
      %73 = vsyncadd [#allocation9], %s72
      %s74 = sshll.u32 [#allocation10], 4
      %s75 = int_to_ptr.vmem [resolvable:$true] %s74
      %80 = dma.hbm_to_vmem [thread:$0]  %s4, 2048, %s75, [#allocation9], 128, 128, 8
    $region21: #{tpu_custom_call.1} parent=1 // pred_fallthru
      _
    // Predicated region
    $region22: #{tpu_custom_call.1} parent=1 // pred_check
      _
    $region23: #{tpu_custom_call.1} parent=1 // pred_check_branch
      %82 = sbr.rel (0) target = $region25
    $region24: #{tpu_custom_call.1} parent=1 // pred_region
      %s84 = ssub.s32 2048, 2048
      %85 = vsyncadd [#allocation12], %s84
      %s86 = sshll.u32 [#allocation11], 4
      %s87 = int_to_ptr.vmem [resolvable:$true] %s86
      %92 = dma.hbm_to_vmem [thread:$0]  %s5, 2048, %s87, [#allocation12], 128, 128, 8
    $region25: #{tpu_custom_call.1} parent=1 // pred_fallthru
      _
    // Predicated region
    $region26: #{tpu_custom_call.1} parent=1 // pred_check
      _
    $region27: #{tpu_custom_call.1} parent=1 // pred_check_branch
      %94 = sbr.rel (0) target = $region29
    $region28: #{tpu_custom_call.1} parent=1 // pred_region
      %s96 = ssub.s32 2048, 2048
      %97 = vsyncadd [#allocation12], %s96
      %s98 = sshll.u32 [#allocation13], 4
      %s99 = int_to_ptr.vmem [resolvable:$true] %s98
      %104 = dma.hbm_to_vmem [thread:$0]  %s6, 2048, %s99, [#allocation12], 128, 128, 8
    $region29: #{tpu_custom_call.1} parent=1 // pred_fallthru
      _
    // Predicated region
    $region30: #{tpu_custom_call.1} parent=1 // pred_check
      _
    $region31: #{tpu_custom_call.1} parent=1 // pred_check_branch
      %106 = sbr.rel (0) target = $region33
    $region32: #{tpu_custom_call.1} parent=1 // pred_region
      _
    $region33: #{tpu_custom_call.1} parent=1 // pred_fallthru
      _
    // Predicated region
    $region34: #{tpu_custom_call.1} parent=1 // pred_check
      _
    $region35: #{tpu_custom_call.1} parent=1 // pred_check_branch
      %108 = sbr.rel (0) target = $region37
    $region36: #{tpu_custom_call.1} parent=1 // pred_region
      _
    $region37: #{tpu_custom_call.1} parent=1 // pred_fallthru
      _
    // Predicated region
    $region38: #{tpu_custom_call.1} parent=1 // pred_check
      _
    $region39: #{tpu_custom_call.1} parent=1 // pred_check_branch
      %110 = sbr.rel (0) target = $region41
    $region40: #{tpu_custom_call.1} parent=1 // pred_region
      _
    $region41: #{tpu_custom_call.1} parent=1 // pred_fallthru
      _
    // Predicated region
    $region42: #{tpu_custom_call.1} parent=1 // pred_check
      _
    $region43: #{tpu_custom_call.1} parent=1 // pred_check_branch
      %112 = sbr.rel (0) target = $region45
    $region44: #{tpu_custom_call.1} parent=1 // pred_region
      _
    $region45: #{tpu_custom_call.1} parent=1 // pred_fallthru
      _
    // Predicated region
    $region46: #{tpu_custom_call.1} parent=1 // pred_check
      _
    $region47: #{tpu_custom_call.1} parent=1 // pred_check_branch
      %114 = sbr.rel (0) target = $region49
    $region48: #{tpu_custom_call.1} parent=1 // pred_region
      %115 = dma.done [#allocation3], 512
    $region49: #{tpu_custom_call.1} parent=1 // pred_fallthru
      _
    // Predicated region
    $region50: #{tpu_custom_call.1} parent=1 // pred_check
      _
    $region51: #{tpu_custom_call.1} parent=1 // pred_check_branch
      %117 = sbr.rel (0) target = $region53
    $region52: #{tpu_custom_call.1} parent=1 // pred_region
      %118 = dma.done [#allocation6], 512
    $region53: #{tpu_custom_call.1} parent=1 // pred_fallthru
      _
    // Predicated region
    $region54: #{tpu_custom_call.1} parent=1 // pred_check
      _
    $region55: #{tpu_custom_call.1} parent=1 // pred_check_branch
      %120 = sbr.rel (0) target = $region57
    $region56: #{tpu_custom_call.1} parent=1 // pred_region
      %121 = dma.done [#allocation6], 512
    $region57: #{tpu_custom_call.1} parent=1 // pred_fallthru
      _
    // Predicated region
    $region58: #{tpu_custom_call.1} parent=1 // pred_check
      _
    $region59: #{tpu_custom_call.1} parent=1 // pred_check_branch
      %123 = sbr.rel (0) target = $region61
    $region60: #{tpu_custom_call.1} parent=1 // pred_region
      %124 = dma.done [#allocation9], 2048
    $region61: #{tpu_custom_call.1} parent=1 // pred_fallthru
      _
    // Predicated region
    $region62: #{tpu_custom_call.1} parent=1 // pred_check
      _
    $region63: #{tpu_custom_call.1} parent=1 // pred_check_branch
      %126 = sbr.rel (0) target = $region65
    $region64: #{tpu_custom_call.1} parent=1 // pred_region
      %127 = dma.done [#allocation9], 2048
    $region65: #{tpu_custom_call.1} parent=1 // pred_fallthru
      _
    // Predicated region
    $region66: #{tpu_custom_call.1} parent=1 // pred_check
      _
    $region67: #{tpu_custom_call.1} parent=1 // pred_check_branch
      %129 = sbr.rel (0) target = $region69
    $region68: #{tpu_custom_call.1} parent=1 // pred_region
      %130 = dma.done [#allocation12], 2048
    $region69: #{tpu_custom_call.1} parent=1 // pred_fallthru
      _
    // Predicated region
    $region70: #{tpu_custom_call.1} parent=1 // pred_check
      _
    $region71: #{tpu_custom_call.1} parent=1 // pred_check_branch
      %132 = sbr.rel (0) target = $region73
    $region72: #{tpu_custom_call.1} parent=1 // pred_region
      %133 = dma.done [#allocation12], 2048
    $region73: #{tpu_custom_call.1} parent=1 // pred_fallthru
      _
    %v134 = vld [vmem:[#allocation2] sm:$0xff]
    %v135 = vld [vmem:[#allocation2 + $0x8] sm:$0xff]
    %v136 = vld [vmem:[#allocation2 + $0x10] sm:$0xff]
    %v137 = vld [vmem:[#allocation2 + $0x18] sm:$0xff]
    %v138 = vld [vmem:[#allocation5] sm:$0xff]
    %v139 = vld [vmem:[#allocation5 + $0x8] sm:$0xff]
    %v140 = vld [vmem:[#allocation5 + $0x10] sm:$0xff]
    %v141 = vld [vmem:[#allocation5 + $0x18] sm:$0xff]
    %v142 = vld [vmem:[#allocation7] sm:$0xff]
    %v143 = vld [vmem:[#allocation7 + $0x8] sm:$0xff]
    %v144 = vld [vmem:[#allocation7 + $0x10] sm:$0xff]
    %v145 = vld [vmem:[#allocation7 + $0x18] sm:$0xff]
    %v146 = vld [vmem:[#allocation8] sm:$0xff]
    %v147 = vld [vmem:[#allocation8 + $0x8] sm:$0xff]
    %v148 = vld [vmem:[#allocation8 + $0x10] sm:$0xff]
    %v149 = vld [vmem:[#allocation8 + $0x18] sm:$0xff]
    %v150 = vld [vmem:[#allocation8 + $0x20] sm:$0xff]
    %v151 = vld [vmem:[#allocation8 + $0x28] sm:$0xff]
    %v152 = vld [vmem:[#allocation8 + $0x30] sm:$0xff]
    %v153 = vld [vmem:[#allocation8 + $0x38] sm:$0xff]
    %v154 = vld [vmem:[#allocation8 + $0x40] sm:$0xff]
    %v155 = vld [vmem:[#allocation8 + $0x48] sm:$0xff]
    %v156 = vld [vmem:[#allocation8 + $0x50] sm:$0xff]
    %v157 = vld [vmem:[#allocation8 + $0x58] sm:$0xff]
    %v158 = vld [vmem:[#allocation8 + $0x60] sm:$0xff]
    %v159 = vld [vmem:[#allocation8 + $0x68] sm:$0xff]
    %v160 = vld [vmem:[#allocation8 + $0x70] sm:$0xff]
    %v161 = vld [vmem:[#allocation8 + $0x78] sm:$0xff]
    %v162 = vld [vmem:[%s7] sm:$0x1]
    %v164 = vlaneseq
    %v165 = vshrl.u32 %v164, 7
    %v166 = vsub.s32 0, %v165
    %v167 = vrot.slane %v162, %v166
    %169 = vmatprep.subr.mxu0 0.0
    %170 = vmatpush1.msra.mxu0 %v146
    %171 = vmatprep.subr.mxu0 0.0
    %172 = vmatpush1.msra.mxu0 %v147
    %173 = vmatprep.subr.mxu0 0.0
    %174 = vmatpush1.msra.mxu0 %v148
    %175 = vmatprep.subr.mxu0 0.0
    %176 = vmatpush1.msra.mxu0 %v149
    %177 = vmatprep.subr.mxu0 0.0
    %178 = vmatpush1.msra.mxu0 %v150
    %179 = vmatprep.subr.mxu0 0.0
    %180 = vmatpush1.msra.mxu0 %v151
    %181 = vmatprep.subr.mxu0 0.0
    %182 = vmatpush1.msra.mxu0 %v152
    %183 = vmatprep.subr.mxu0 0.0
    %184 = vmatpush1.msra.mxu0 %v153
    %185 = vmatprep.subr.mxu0 0.0
    %186 = vmatpush1.msra.mxu0 %v154
    %187 = vmatprep.subr.mxu0 0.0
    %188 = vmatpush1.msra.mxu0 %v155
    %189 = vmatprep.subr.mxu0 0.0
    %190 = vmatpush1.msra.mxu0 %v156
    %191 = vmatprep.subr.mxu0 0.0
    %192 = vmatpush1.msra.mxu0 %v157
    %193 = vmatprep.subr.mxu0 0.0
    %194 = vmatpush1.msra.mxu0 %v158
    %195 = vmatprep.subr.mxu0 0.0
    %196 = vmatpush1.msra.mxu0 %v159
    %197 = vmatprep.subr.mxu0 0.0
    %198 = vmatpush1.msra.mxu0 %v160
    %199 = vmatprep.subr.mxu0 0.0
    %200 = vmatpush1.msra.mxu0 %v161
    %201 = vmatprep.subr.mxu0 0.0
    %202 = vmatpush1.msra.mxu0 0.0
    %203 = vmatprep.subr.mxu0 0.0
    %204 = vmatpush1.msra.mxu0 0.0
    %205 = vmatprep.subr.mxu0 0.0
    %206 = vmatpush1.msra.mxu0 0.0
    %207 = vmatprep.subr.mxu0 0.0
    %208 = vmatpush1.msra.mxu0 0.0
    %209 = vmatprep.subr.mxu0 0.0
    %210 = vmatpush1.msra.mxu0 0.0
    %211 = vmatprep.subr.mxu0 0.0
    %212 = vmatpush1.msra.mxu0 0.0
    %213 = vmatprep.subr.mxu0 0.0
    %214 = vmatpush1.msra.mxu0 0.0
    %215 = vmatprep.subr.mxu0 0.0
    %216 = vmatpush1.msra.mxu0 0.0
    %217 = vmatprep.subr.mxu0 0.0
    %218 = vmatpush1.msra.mxu0 0.0
    %219 = vmatprep.subr.mxu0 0.0
    %220 = vmatpush1.msra.mxu0 0.0
    %221 = vmatprep.subr.mxu0 0.0
    %222 = vmatpush1.msra.mxu0 0.0
    %223 = vmatprep.subr.mxu0 0.0
    %224 = vmatpush1.msra.mxu0 0.0
    %225 = vmatprep.subr.mxu0 0.0
    %226 = vmatpush1.msra.mxu0 0.0
    %227 = vmatprep.subr.mxu0 0.0
    %228 = vmatpush1.msra.mxu0 0.0
    %229 = vmatprep.subr.mxu0 0.0
    %230 = vmatpush1.msra.mxu0 0.0
    %231 = vmatprep.subr.mxu0 0.0
    %232 = vmatpush1.msra.mxu0 0.0
    %233 = vmatprep.mubr.f32.mxu0 0.0
    %234 = vmatmul.mubr.f32.gmra.mrb[0].mxu0 %v134
    %v235 = vpop.f32.mrb[0].mxu0
    %v236 = vadd.f32 %v167, %v235
    %v237 = vpop.f32.mrb[0].mxu0
    %238 = vmatprep.mubr.f32.mxu0 0.0
    %239 = vmatmul.mubr.f32.gmra.mrb[0].mxu0 %v135
    %v240 = vpop.f32.mrb[0].mxu0
    %v241 = vadd.f32 %v167, %v240
    %v242 = vpop.f32.mrb[0].mxu0
    %243 = vmatprep.mubr.f32.mxu0 0.0
    %244 = vmatmul.mubr.f32.gmra.mrb[0].mxu0 %v136
    %v245 = vpop.f32.mrb[0].mxu0
    %v246 = vadd.f32 %v167, %v245
    %v247 = vpop.f32.mrb[0].mxu0
    %248 = vmatprep.mubr.f32.mxu0 0.0
    %249 = vmatmul.mubr.f32.gmra.mrb[0].mxu0 %v137
    %v250 = vpop.f32.mrb[0].mxu0
    %v251 = vadd.f32 %v167, %v250
    %v252 = vpop.f32.mrb[0].mxu0
    %253 = vdwg.mxu0
    %v254 = vld [vmem:[#allocation10] sm:$0xff]
    %v255 = vld [vmem:[#allocation10 + $0x8] sm:$0xff]
    %v256 = vld [vmem:[#allocation10 + $0x10] sm:$0xff]
    %v257 = vld [vmem:[#allocation10 + $0x18] sm:$0xff]
    %v258 = vld [vmem:[#allocation10 + $0x20] sm:$0xff]
    %v259 = vld [vmem:[#allocation10 + $0x28] sm:$0xff]
    %v260 = vld [vmem:[#allocation10 + $0x30] sm:$0xff]
    %v261 = vld [vmem:[#allocation10 + $0x38] sm:$0xff]
    %v262 = vld [vmem:[#allocation10 + $0x40] sm:$0xff]
    %v263 = vld [vmem:[#allocation10 + $0x48] sm:$0xff]
    %v264 = vld [vmem:[#allocation10 + $0x50] sm:$0xff]
    %v265 = vld [vmem:[#allocation10 + $0x58] sm:$0xff]
    %v266 = vld [vmem:[#allocation10 + $0x60] sm:$0xff]
    %v267 = vld [vmem:[#allocation10 + $0x68] sm:$0xff]
    %v268 = vld [vmem:[#allocation10 + $0x70] sm:$0xff]
    %v269 = vld [vmem:[#allocation10 + $0x78] sm:$0xff]
    %v270 = vld [vmem:[%s8] sm:$0x1]
    %v272 = vlaneseq
    %v273 = vshrl.u32 %v272, 7
    %v274 = vsub.s32 0, %v273
    %v275 = vrot.slane %v270, %v274
    %277 = vmatprep.subr.mxu0 0.0
    %278 = vmatpush1.msra.mxu0 %v254
    %279 = vmatprep.subr.mxu0 0.0
    %280 = vmatpush1.msra.mxu0 %v255
    %281 = vmatprep.subr.mxu0 0.0
    %282 = vmatpush1.msra.mxu0 %v256
    %283 = vmatprep.subr.mxu0 0.0
    %284 = vmatpush1.msra.mxu0 %v257
    %285 = vmatprep.subr.mxu0 0.0
    %286 = vmatpush1.msra.mxu0 %v258
    %287 = vmatprep.subr.mxu0 0.0
    %288 = vmatpush1.msra.mxu0 %v259
    %289 = vmatprep.subr.mxu0 0.0
    %290 = vmatpush1.msra.mxu0 %v260
    %291 = vmatprep.subr.mxu0 0.0
    %292 = vmatpush1.msra.mxu0 %v261
    %293 = vmatprep.subr.mxu0 0.0
    %294 = vmatpush1.msra.mxu0 %v262
    %295 = vmatprep.subr.mxu0 0.0
    %296 = vmatpush1.msra.mxu0 %v263
    %297 = vmatprep.subr.mxu0 0.0
    %298 = vmatpush1.msra.mxu0 %v264
    %299 = vmatprep.subr.mxu0 0.0
    %300 = vmatpush1.msra.mxu0 %v265
    %301 = vmatprep.subr.mxu0 0.0
    %302 = vmatpush1.msra.mxu0 %v266
    %303 = vmatprep.subr.mxu0 0.0
    %304 = vmatpush1.msra.mxu0 %v267
    %305 = vmatprep.subr.mxu0 0.0
    %306 = vmatpush1.msra.mxu0 %v268
    %307 = vmatprep.subr.mxu0 0.0
    %308 = vmatpush1.msra.mxu0 %v269
    %309 = vmatprep.subr.mxu0 0.0
    %310 = vmatpush1.msra.mxu0 0.0
    %311 = vmatprep.subr.mxu0 0.0
    %312 = vmatpush1.msra.mxu0 0.0
    %313 = vmatprep.subr.mxu0 0.0
    %314 = vmatpush1.msra.mxu0 0.0
    %315 = vmatprep.subr.mxu0 0.0
    %316 = vmatpush1.msra.mxu0 0.0
    %317 = vmatprep.subr.mxu0 0.0
    %318 = vmatpush1.msra.mxu0 0.0
    %319 = vmatprep.subr.mxu0 0.0
    %320 = vmatpush1.msra.mxu0 0.0
    %321 = vmatprep.subr.mxu0 0.0
    %322 = vmatpush1.msra.mxu0 0.0
    %323 = vmatprep.subr.mxu0 0.0
    %324 = vmatpush1.msra.mxu0 0.0
    %325 = vmatprep.subr.mxu0 0.0
    %326 = vmatpush1.msra.mxu0 0.0
    %327 = vmatprep.subr.mxu0 0.0
    %328 = vmatpush1.msra.mxu0 0.0
    %329 = vmatprep.subr.mxu0 0.0
    %330 = vmatpush1.msra.mxu0 0.0
    %331 = vmatprep.subr.mxu0 0.0
    %332 = vmatpush1.msra.mxu0 0.0
    %333 = vmatprep.subr.mxu0 0.0
    %334 = vmatpush1.msra.mxu0 0.0
    %335 = vmatprep.subr.mxu0 0.0
    %336 = vmatpush1.msra.mxu0 0.0
    %337 = vmatprep.subr.mxu0 0.0
    %338 = vmatpush1.msra.mxu0 0.0
    %339 = vmatprep.subr.mxu0 0.0
    %340 = vmatpush1.msra.mxu0 0.0
    %341 = vmatprep.mubr.f32.mxu0 0.0
    %342 = vmatmul.mubr.f32.gmra.mrb[0].mxu0 %v138
    %v343 = vpop.f32.mrb[0].mxu0
    %v344 = vadd.f32 %v275, %v343
    %v345 = vpop.f32.mrb[0].mxu0
    %346 = vmatprep.mubr.f32.mxu0 0.0
    %347 = vmatmul.mubr.f32.gmra.mrb[0].mxu0 %v139
    %v348 = vpop.f32.mrb[0].mxu0
    %v349 = vadd.f32 %v275, %v348
    %v350 = vpop.f32.mrb[0].mxu0
    %351 = vmatprep.mubr.f32.mxu0 0.0
    %352 = vmatmul.mubr.f32.gmra.mrb[0].mxu0 %v140
    %v353 = vpop.f32.mrb[0].mxu0
    %v354 = vadd.f32 %v275, %v353
    %v355 = vpop.f32.mrb[0].mxu0
    %356 = vmatprep.mubr.f32.mxu0 0.0
    %357 = vmatmul.mubr.f32.gmra.mrb[0].mxu0 %v141
    %v358 = vpop.f32.mrb[0].mxu0
    %v359 = vadd.f32 %v275, %v358
    %v360 = vpop.f32.mrb[0].mxu0
    %361 = vdwg.mxu0
    %v362 = vld [vmem:[#allocation11] sm:$0xff]
    %v363 = vld [vmem:[#allocation11 + $0x8] sm:$0xff]
    %v364 = vld [vmem:[#allocation11 + $0x10] sm:$0xff]
    %v365 = vld [vmem:[#allocation11 + $0x18] sm:$0xff]
    %v366 = vld [vmem:[#allocation11 + $0x20] sm:$0xff]
    %v367 = vld [vmem:[#allocation11 + $0x28] sm:$0xff]
    %v368 = vld [vmem:[#allocation11 + $0x30] sm:$0xff]
    %v369 = vld [vmem:[#allocation11 + $0x38] sm:$0xff]
    %v370 = vld [vmem:[#allocation11 + $0x40] sm:$0xff]
    %v371 = vld [vmem:[#allocation11 + $0x48] sm:$0xff]
    %v372 = vld [vmem:[#allocation11 + $0x50] sm:$0xff]
    %v373 = vld [vmem:[#allocation11 + $0x58] sm:$0xff]
    %v374 = vld [vmem:[#allocation11 + $0x60] sm:$0xff]
    %v375 = vld [vmem:[#allocation11 + $0x68] sm:$0xff]
    %v376 = vld [vmem:[#allocation11 + $0x70] sm:$0xff]
    %v377 = vld [vmem:[#allocation11 + $0x78] sm:$0xff]
    %v378 = vld [vmem:[%s9] sm:$0x1]
    %v380 = vlaneseq
    %v381 = vshrl.u32 %v380, 7
    %v382 = vsub.s32 0, %v381
    %v383 = vrot.slane %v378, %v382
    %385 = vmatprep.subr.mxu0 0.0
    %386 = vmatpush1.msra.mxu0 %v362
    %387 = vmatprep.subr.mxu0 0.0
    %388 = vmatpush1.msra.mxu0 %v363
    %389 = vmatprep.subr.mxu0 0.0
    %390 = vmatpush1.msra.mxu0 %v364
    %391 = vmatprep.subr.mxu0 0.0
    %392 = vmatpush1.msra.mxu0 %v365
    %393 = vmatprep.subr.mxu0 0.0
    %394 = vmatpush1.msra.mxu0 %v366
    %395 = vmatprep.subr.mxu0 0.0
    %396 = vmatpush1.msra.mxu0 %v367
    %397 = vmatprep.subr.mxu0 0.0
    %398 = vmatpush1.msra.mxu0 %v368
    %399 = vmatprep.subr.mxu0 0.0
    %400 = vmatpush1.msra.mxu0 %v369
    %401 = vmatprep.subr.mxu0 0.0
    %402 = vmatpush1.msra.mxu0 %v370
    %403 = vmatprep.subr.mxu0 0.0
    %404 = vmatpush1.msra.mxu0 %v371
    %405 = vmatprep.subr.mxu0 0.0
    %406 = vmatpush1.msra.mxu0 %v372
    %407 = vmatprep.subr.mxu0 0.0
    %408 = vmatpush1.msra.mxu0 %v373
    %409 = vmatprep.subr.mxu0 0.0
    %410 = vmatpush1.msra.mxu0 %v374
    %411 = vmatprep.subr.mxu0 0.0
    %412 = vmatpush1.msra.mxu0 %v375
    %413 = vmatprep.subr.mxu0 0.0
    %414 = vmatpush1.msra.mxu0 %v376
    %415 = vmatprep.subr.mxu0 0.0
    %416 = vmatpush1.msra.mxu0 %v377
    %417 = vmatprep.subr.mxu0 0.0
    %418 = vmatpush1.msra.mxu0 0.0
    %419 = vmatprep.subr.mxu0 0.0
    %420 = vmatpush1.msra.mxu0 0.0
    %421 = vmatprep.subr.mxu0 0.0
    %422 = vmatpush1.msra.mxu0 0.0
    %423 = vmatprep.subr.mxu0 0.0
    %424 = vmatpush1.msra.mxu0 0.0
    %425 = vmatprep.subr.mxu0 0.0
    %426 = vmatpush1.msra.mxu0 0.0
    %427 = vmatprep.subr.mxu0 0.0
    %428 = vmatpush1.msra.mxu0 0.0
    %429 = vmatprep.subr.mxu0 0.0
    %430 = vmatpush1.msra.mxu0 0.0
    %431 = vmatprep.subr.mxu0 0.0
    %432 = vmatpush1.msra.mxu0 0.0
    %433 = vmatprep.subr.mxu0 0.0
    %434 = vmatpush1.msra.mxu0 0.0
    %435 = vmatprep.subr.mxu0 0.0
    %436 = vmatpush1.msra.mxu0 0.0
    %437 = vmatprep.subr.mxu0 0.0
    %438 = vmatpush1.msra.mxu0 0.0
    %439 = vmatprep.subr.mxu0 0.0
    %440 = vmatpush1.msra.mxu0 0.0
    %441 = vmatprep.subr.mxu0 0.0
    %442 = vmatpush1.msra.mxu0 0.0
    %443 = vmatprep.subr.mxu0 0.0
    %444 = vmatpush1.msra.mxu0 0.0
    %445 = vmatprep.subr.mxu0 0.0
    %446 = vmatpush1.msra.mxu0 0.0
    %447 = vmatprep.subr.mxu0 0.0
    %448 = vmatpush1.msra.mxu0 0.0
    %449 = vmatprep.mubr.f32.mxu0 0.0
    %450 = vmatmul.mubr.f32.gmra.mrb[0].mxu0 %v142
    %v451 = vpop.f32.mrb[0].mxu0
    %v452 = vadd.f32 %v383, %v451
    %v453 = vpop.f32.mrb[0].mxu0
    %454 = vmatprep.mubr.f32.mxu0 0.0
    %455 = vmatmul.mubr.f32.gmra.mrb[0].mxu0 %v143
    %v456 = vpop.f32.mrb[0].mxu0
    %v457 = vadd.f32 %v383, %v456
    %v458 = vpop.f32.mrb[0].mxu0
    %459 = vmatprep.mubr.f32.mxu0 0.0
    %460 = vmatmul.mubr.f32.gmra.mrb[0].mxu0 %v144
    %v461 = vpop.f32.mrb[0].mxu0
    %v462 = vadd.f32 %v383, %v461
    %v463 = vpop.f32.mrb[0].mxu0
    %464 = vmatprep.mubr.f32.mxu0 0.0
    %465 = vmatmul.mubr.f32.gmra.mrb[0].mxu0 %v145
    %v466 = vpop.f32.mrb[0].mxu0
    %v467 = vadd.f32 %v383, %v466
    %v468 = vpop.f32.mrb[0].mxu0
    %469 = vdwg.mxu0
    %v470 = vlaneseq
    %v471 = vand.u32 %v470, 127
    %vm472 = vcmp.lt.s32.totalorder %v471, 10
    %v473 = vsel %vm472, 0.0, -1e+09
    %vm474 = vcmask 261120
    %v476 = vsel %vm474, %v236, 0
    %v479 = vsel %vm474, %v241, 0
    %v482 = vsel %vm474, %v344, 0
    %v485 = vsel %vm474, %v349, 0
    %487 = vmatprep.subr.mxu0 0.0
    %488 = vmatpush1.xpose.msra.mxu0 %v482
    %489 = vmatprep.subr.mxu0 0.0
    %490 = vmatpush1.xpose.msra.mxu0 %v485
    %491 = vmatprep.subr.mxu0 0.0
    %492 = vmatpush1.xpose.msra.mxu0 0.0
    %493 = vmatprep.subr.mxu0 0.0
    %494 = vmatpush1.xpose.msra.mxu0 0.0
    %495 = vmatprep.subr.mxu0 0.0
    %496 = vmatpush1.xpose.msra.mxu0 0.0
    %497 = vmatprep.subr.mxu0 0.0
    %498 = vmatpush1.xpose.msra.mxu0 0.0
    %499 = vmatprep.subr.mxu0 0.0
    %500 = vmatpush1.xpose.msra.mxu0 0.0
    %501 = vmatprep.subr.mxu0 0.0
    %502 = vmatpush1.xpose.msra.mxu0 0.0
    %503 = vmatprep.subr.mxu0 0.0
    %504 = vmatpush1.xpose.msra.mxu0 0.0
    %505 = vmatprep.subr.mxu0 0.0
    %506 = vmatpush1.xpose.msra.mxu0 0.0
    %507 = vmatprep.subr.mxu0 0.0
    %508 = vmatpush1.xpose.msra.mxu0 0.0
    %509 = vmatprep.subr.mxu0 0.0
    %510 = vmatpush1.xpose.msra.mxu0 0.0
    %511 = vmatprep.subr.mxu0 0.0
    %512 = vmatpush1.xpose.msra.mxu0 0.0
    %513 = vmatprep.subr.mxu0 0.0
    %514 = vmatpush1.xpose.msra.mxu0 0.0
    %515 = vmatprep.subr.mxu0 0.0
    %516 = vmatpush1.xpose.msra.mxu0 0.0
    %517 = vmatprep.subr.mxu0 0.0
    %518 = vmatpush1.xpose.msra.mxu0 0.0
    %519 = vmatprep.subr.mxu0 0.0
    %520 = vmatpush1.xpose.msra.mxu0 0.0
    %521 = vmatprep.subr.mxu0 0.0
    %522 = vmatpush1.xpose.msra.mxu0 0.0
    %523 = vmatprep.subr.mxu0 0.0
    %524 = vmatpush1.xpose.msra.mxu0 0.0
    %525 = vmatprep.subr.mxu0 0.0
    %526 = vmatpush1.xpose.msra.mxu0 0.0
    %527 = vmatprep.subr.mxu0 0.0
    %528 = vmatpush1.xpose.msra.mxu0 0.0
    %529 = vmatprep.subr.mxu0 0.0
    %530 = vmatpush1.xpose.msra.mxu0 0.0
    %531 = vmatprep.subr.mxu0 0.0
    %532 = vmatpush1.xpose.msra.mxu0 0.0
    %533 = vmatprep.subr.mxu0 0.0
    %534 = vmatpush1.xpose.msra.mxu0 0.0
    %535 = vmatprep.subr.mxu0 0.0
    %536 = vmatpush1.xpose.msra.mxu0 0.0
    %537 = vmatprep.subr.mxu0 0.0
    %538 = vmatpush1.xpose.msra.mxu0 0.0
    %539 = vmatprep.subr.mxu0 0.0
    %540 = vmatpush1.xpose.msra.mxu0 0.0
    %541 = vmatprep.subr.mxu0 0.0
    %542 = vmatpush1.xpose.msra.mxu0 0.0
    %543 = vmatprep.subr.mxu0 0.0
    %544 = vmatpush1.xpose.msra.mxu0 0.0
    %545 = vmatprep.subr.mxu0 0.0
    %546 = vmatpush1.xpose.msra.mxu0 0.0
    %547 = vmatprep.subr.mxu0 0.0
    %548 = vmatpush1.xpose.msra.mxu0 0.0
    %549 = vmatprep.subr.mxu0 0.0
    %550 = vmatpush1.xpose.msra.mxu0 0.0
    %551 = vmatprep.mubr.f32.mxu0 0.0
    %552 = vmatmul.mubr.f32.gmra.mrb[0].mxu0 %v476
    %v553 = vpop.f32.mrb[0].mxu0
    %v554 = vadd.f32 %v473, %v553
    %v555 = vpop.f32.mrb[0].mxu0
    %556 = vmatprep.mubr.f32.mxu0 0.0
    %557 = vmatmul.mubr.f32.gmra.mrb[0].mxu0 %v479
    %v558 = vpop.f32.mrb[0].mxu0
    %v559 = vadd.f32 %v473, %v558
    %v560 = vpop.f32.mrb[0].mxu0
    %561 = vdwg.mxu0
    %vm562 = vcmask 130048
    %v563 = vsel %vm562, %v554, -inf
    %564 = vmax.xlane.f32.xlu0 %v563
    %v565 = vpop.xlane.xlu0 %564
    %v566 = vsel %vm562, %v559, -inf
    %567 = vmax.xlane.f32.xlu0 %v566
    %v568 = vpop.xlane.xlu0 %567
    %v569 = vsub.f32 %v554, %v565
    %v570 = vsub.f32 %v559, %v568
    %v571 = vmul.f32 %v569, 1.442695
    %v572 = vpow.pop %v571
    %v573 = vmul.f32 %v570, 1.442695
    %v574 = vpow.pop %v573
    %v575 = vsel %vm562, %v572, 0.0
    %576 = vadd.xlane.f32.xlu0 %v575
    %v577 = vpop.xlane.xlu0 %576
    %v578 = vsel %vm562, %v574, 0.0
    %579 = vadd.xlane.f32.xlu0 %v578
    %v580 = vpop.xlane.xlu0 %579
    %v581 = vrcp.pop %v577
    %v582 = vrcp.pop %v580
    %v583 = vmul.f32 %v572, %v581
    %v584 = vmul.f32 %v574, %v582
    %v586 = vsel %vm562, %v583, 0
    %v589 = vsel %vm562, %v584, 0
    %591 = vmatprep.subr.mxu0 0.0
    %592 = vmatpush1.msra.mxu0 %v452
    %593 = vmatprep.subr.mxu0 0.0
    %594 = vmatpush1.msra.mxu0 %v457
    %595 = vmatprep.subr.mxu0 0.0
    %596 = vmatpush1.msra.mxu0 0.0
    %597 = vmatprep.subr.mxu0 0.0
    %598 = vmatpush1.msra.mxu0 0.0
    %599 = vmatprep.subr.mxu0 0.0
    %600 = vmatpush1.msra.mxu0 0.0
    %601 = vmatprep.subr.mxu0 0.0
    %602 = vmatpush1.msra.mxu0 0.0
    %603 = vmatprep.subr.mxu0 0.0
    %604 = vmatpush1.msra.mxu0 0.0
    %605 = vmatprep.subr.mxu0 0.0
    %606 = vmatpush1.msra.mxu0 0.0
    %607 = vmatprep.subr.mxu0 0.0
    %608 = vmatpush1.msra.mxu0 0.0
    %609 = vmatprep.subr.mxu0 0.0
    %610 = vmatpush1.msra.mxu0 0.0
    %611 = vmatprep.subr.mxu0 0.0
    %612 = vmatpush1.msra.mxu0 0.0
    %613 = vmatprep.subr.mxu0 0.0
    %614 = vmatpush1.msra.mxu0 0.0
    %615 = vmatprep.subr.mxu0 0.0
    %616 = vmatpush1.msra.mxu0 0.0
    %617 = vmatprep.subr.mxu0 0.0
    %618 = vmatpush1.msra.mxu0 0.0
    %619 = vmatprep.subr.mxu0 0.0
    %620 = vmatpush1.msra.mxu0 0.0
    %621 = vmatprep.subr.mxu0 0.0
    %622 = vmatpush1.msra.mxu0 0.0
    %623 = vmatprep.subr.mxu0 0.0
    %624 = vmatpush1.msra.mxu0 0.0
    %625 = vmatprep.subr.mxu0 0.0
    %626 = vmatpush1.msra.mxu0 0.0
    %627 = vmatprep.subr.mxu0 0.0
    %628 = vmatpush1.msra.mxu0 0.0
    %629 = vmatprep.subr.mxu0 0.0
    %630 = vmatpush1.msra.mxu0 0.0
    %631 = vmatprep.subr.mxu0 0.0
    %632 = vmatpush1.msra.mxu0 0.0
    %633 = vmatprep.subr.mxu0 0.0
    %634 = vmatpush1.msra.mxu0 0.0
    %635 = vmatprep.subr.mxu0 0.0
    %636 = vmatpush1.msra.mxu0 0.0
    %637 = vmatprep.subr.mxu0 0.0
    %638 = vmatpush1.msra.mxu0 0.0
    %639 = vmatprep.subr.mxu0 0.0
    %640 = vmatpush1.msra.mxu0 0.0
    %641 = vmatprep.subr.mxu0 0.0
    %642 = vmatpush1.msra.mxu0 0.0
    %643 = vmatprep.subr.mxu0 0.0
    %644 = vmatpush1.msra.mxu0 0.0
    %645 = vmatprep.subr.mxu0 0.0
    %646 = vmatpush1.msra.mxu0 0.0
    %647 = vmatprep.subr.mxu0 0.0
    %648 = vmatpush1.msra.mxu0 0.0
    %649 = vmatprep.subr.mxu0 0.0
    %650 = vmatpush1.msra.mxu0 0.0
    %651 = vmatprep.subr.mxu0 0.0
    %652 = vmatpush1.msra.mxu0 0.0
    %653 = vmatprep.subr.mxu0 0.0
    %654 = vmatpush1.msra.mxu0 0.0
    %655 = vmatprep.mubr.f32.mxu0 0.0
    %656 = vmatmul.mubr.f32.gmra.mrb[0].mxu0 %v586
    %v657 = vpop.f32.mrb[0].mxu0
    %v658 = vadd.f32 0.0, %v657
    %v659 = vpop.f32.mrb[0].mxu0
    %660 = vmatprep.mubr.f32.mxu0 0.0
    %661 = vmatmul.mubr.f32.gmra.mrb[0].mxu0 %v589
    %v662 = vpop.f32.mrb[0].mxu0
    %v663 = vadd.f32 0.0, %v662
    %v664 = vpop.f32.mrb[0].mxu0
    %665 = vdwg.mxu0
    %666 = vrot.lane.b32.xlu0 %v236, 96
    %v667 = vpop.permute.xlu0 %666
    %668 = vrot.lane.b32.xlu0 %v241, 96
    %v669 = vpop.permute.xlu0 %668
    %670 = vrot.lane.b32.xlu0 %v344, 96
    %v671 = vpop.permute.xlu0 %670
    %672 = vrot.lane.b32.xlu0 %v349, 96
    %v673 = vpop.permute.xlu0 %672
    %v674 = vsel %vm474, %v667, 0
    %v676 = vsel %vm474, %v669, 0
    %v678 = vsel %vm474, %v671, 0
    %v680 = vsel %vm474, %v673, 0
    %682 = vmatprep.subr.mxu0 0.0
    %683 = vmatpush1.xpose.msra.mxu0 %v678
    %684 = vmatprep.subr.mxu0 0.0
    %685 = vmatpush1.xpose.msra.mxu0 %v680
    %686 = vmatprep.subr.mxu0 0.0
    %687 = vmatpush1.xpose.msra.mxu0 0.0
    %688 = vmatprep.subr.mxu0 0.0
    %689 = vmatpush1.xpose.msra.mxu0 0.0
    %690 = vmatprep.subr.mxu0 0.0
    %691 = vmatpush1.xpose.msra.mxu0 0.0
    %692 = vmatprep.subr.mxu0 0.0
    %693 = vmatpush1.xpose.msra.mxu0 0.0
    %694 = vmatprep.subr.mxu0 0.0
    %695 = vmatpush1.xpose.msra.mxu0 0.0
    %696 = vmatprep.subr.mxu0 0.0
    %697 = vmatpush1.xpose.msra.mxu0 0.0
    %698 = vmatprep.subr.mxu0 0.0
    %699 = vmatpush1.xpose.msra.mxu0 0.0
    %700 = vmatprep.subr.mxu0 0.0
    %701 = vmatpush1.xpose.msra.mxu0 0.0
    %702 = vmatprep.subr.mxu0 0.0
    %703 = vmatpush1.xpose.msra.mxu0 0.0
    %704 = vmatprep.subr.mxu0 0.0
    %705 = vmatpush1.xpose.msra.mxu0 0.0
    %706 = vmatprep.subr.mxu0 0.0
    %707 = vmatpush1.xpose.msra.mxu0 0.0
    %708 = vmatprep.subr.mxu0 0.0
    %709 = vmatpush1.xpose.msra.mxu0 0.0
    %710 = vmatprep.subr.mxu0 0.0
    %711 = vmatpush1.xpose.msra.mxu0 0.0
    %712 = vmatprep.subr.mxu0 0.0
    %713 = vmatpush1.xpose.msra.mxu0 0.0
    %714 = vmatprep.subr.mxu0 0.0
    %715 = vmatpush1.xpose.msra.mxu0 0.0
    %716 = vmatprep.subr.mxu0 0.0
    %717 = vmatpush1.xpose.msra.mxu0 0.0
    %718 = vmatprep.subr.mxu0 0.0
    %719 = vmatpush1.xpose.msra.mxu0 0.0
    %720 = vmatprep.subr.mxu0 0.0
    %721 = vmatpush1.xpose.msra.mxu0 0.0
    %722 = vmatprep.subr.mxu0 0.0
    %723 = vmatpush1.xpose.msra.mxu0 0.0
    %724 = vmatprep.subr.mxu0 0.0
    %725 = vmatpush1.xpose.msra.mxu0 0.0
    %726 = vmatprep.subr.mxu0 0.0
    %727 = vmatpush1.xpose.msra.mxu0 0.0
    %728 = vmatprep.subr.mxu0 0.0
    %729 = vmatpush1.xpose.msra.mxu0 0.0
    %730 = vmatprep.subr.mxu0 0.0
    %731 = vmatpush1.xpose.msra.mxu0 0.0
    %732 = vmatprep.subr.mxu0 0.0
    %733 = vmatpush1.xpose.msra.mxu0 0.0
    %734 = vmatprep.subr.mxu0 0.0
    %735 = vmatpush1.xpose.msra.mxu0 0.0
    %736 = vmatprep.subr.mxu0 0.0
    %737 = vmatpush1.xpose.msra.mxu0 0.0
    %738 = vmatprep.subr.mxu0 0.0
    %739 = vmatpush1.xpose.msra.mxu0 0.0
    %740 = vmatprep.subr.mxu0 0.0
    %741 = vmatpush1.xpose.msra.mxu0 0.0
    %742 = vmatprep.subr.mxu0 0.0
    %743 = vmatpush1.xpose.msra.mxu0 0.0
    %744 = vmatprep.subr.mxu0 0.0
    %745 = vmatpush1.xpose.msra.mxu0 0.0
    %746 = vmatprep.mubr.f32.mxu0 0.0
    %747 = vmatmul.mubr.f32.gmra.mrb[0].mxu0 %v674
    %v748 = vpop.f32.mrb[0].mxu0
    %v749 = vadd.f32 %v473, %v748
    %v750 = vpop.f32.mrb[0].mxu0
    %751 = vmatprep.mubr.f32.mxu0 0.0
    %752 = vmatmul.mubr.f32.gmra.mrb[0].mxu0 %v676
    %v753 = vpop.f32.mrb[0].mxu0
    %v754 = vadd.f32 %v473, %v753
    %v755 = vpop.f32.mrb[0].mxu0
    %756 = vdwg.mxu0
    %v757 = vsel %vm562, %v749, -inf
    %758 = vmax.xlane.f32.xlu0 %v757
    %v759 = vpop.xlane.xlu0 %758
    %v760 = vsel %vm562, %v754, -inf
    %761 = vmax.xlane.f32.xlu0 %v760
    %v762 = vpop.xlane.xlu0 %761
    %v763 = vsub.f32 %v749, %v759
    %v764 = vsub.f32 %v754, %v762
    %v765 = vmul.f32 %v763, 1.442695
    %v766 = vpow.pop %v765
    %v767 = vmul.f32 %v764, 1.442695
    %v768 = vpow.pop %v767
    %v769 = vsel %vm562, %v766, 0.0
    %770 = vadd.xlane.f32.xlu0 %v769
    %v771 = vpop.xlane.xlu0 %770
    %v772 = vsel %vm562, %v768, 0.0
    %773 = vadd.xlane.f32.xlu0 %v772
    %v774 = vpop.xlane.xlu0 %773
    %v775 = vrcp.pop %v771
    %v776 = vrcp.pop %v774
    %v777 = vmul.f32 %v766, %v775
    %v778 = vmul.f32 %v768, %v776
    %781 = vrot.lane.b32.xlu0 %v452, 96
    %v782 = vpop.permute.xlu0 %781
    %783 = vrot.lane.b32.xlu0 %v457, 96
    %v784 = vpop.permute.xlu0 %783
    %v788 = vsel %vm562, %v777, 0
    %v791 = vsel %vm562, %v778, 0
    %793 = vmatprep.subr.mxu0 0.0
    %794 = vmatpush1.msra.mxu0 %v782
    %795 = vmatprep.subr.mxu0 0.0
    %796 = vmatpush1.msra.mxu0 %v784
    %797 = vmatprep.subr.mxu0 0.0
    %798 = vmatpush1.msra.mxu0 0.0
    %799 = vmatprep.subr.mxu0 0.0
    %800 = vmatpush1.msra.mxu0 0.0
    %801 = vmatprep.subr.mxu0 0.0
    %802 = vmatpush1.msra.mxu0 0.0
    %803 = vmatprep.subr.mxu0 0.0
    %804 = vmatpush1.msra.mxu0 0.0
    %805 = vmatprep.subr.mxu0 0.0
    %806 = vmatpush1.msra.mxu0 0.0
    %807 = vmatprep.subr.mxu0 0.0
    %808 = vmatpush1.msra.mxu0 0.0
    %809 = vmatprep.subr.mxu0 0.0
    %810 = vmatpush1.msra.mxu0 0.0
    %811 = vmatprep.subr.mxu0 0.0
    %812 = vmatpush1.msra.mxu0 0.0
    %813 = vmatprep.subr.mxu0 0.0
    %814 = vmatpush1.msra.mxu0 0.0
    %815 = vmatprep.subr.mxu0 0.0
    %816 = vmatpush1.msra.mxu0 0.0
    %817 = vmatprep.subr.mxu0 0.0
    %818 = vmatpush1.msra.mxu0 0.0
    %819 = vmatprep.subr.mxu0 0.0
    %820 = vmatpush1.msra.mxu0 0.0
    %821 = vmatprep.subr.mxu0 0.0
    %822 = vmatpush1.msra.mxu0 0.0
    %823 = vmatprep.subr.mxu0 0.0
    %824 = vmatpush1.msra.mxu0 0.0
    %825 = vmatprep.subr.mxu0 0.0
    %826 = vmatpush1.msra.mxu0 0.0
    %827 = vmatprep.subr.mxu0 0.0
    %828 = vmatpush1.msra.mxu0 0.0
    %829 = vmatprep.subr.mxu0 0.0
    %830 = vmatpush1.msra.mxu0 0.0
    %831 = vmatprep.subr.mxu0 0.0
    %832 = vmatpush1.msra.mxu0 0.0
    %833 = vmatprep.subr.mxu0 0.0
    %834 = vmatpush1.msra.mxu0 0.0
    %835 = vmatprep.subr.mxu0 0.0
    %836 = vmatpush1.msra.mxu0 0.0
    %837 = vmatprep.subr.mxu0 0.0
    %838 = vmatpush1.msra.mxu0 0.0
    %839 = vmatprep.subr.mxu0 0.0
    %840 = vmatpush1.msra.mxu0 0.0
    %841 = vmatprep.subr.mxu0 0.0
    %842 = vmatpush1.msra.mxu0 0.0
    %843 = vmatprep.subr.mxu0 0.0
    %844 = vmatpush1.msra.mxu0 0.0
    %845 = vmatprep.subr.mxu0 0.0
    %846 = vmatpush1.msra.mxu0 0.0
    %847 = vmatprep.subr.mxu0 0.0
    %848 = vmatpush1.msra.mxu0 0.0
    %849 = vmatprep.subr.mxu0 0.0
    %850 = vmatpush1.msra.mxu0 0.0
    %851 = vmatprep.subr.mxu0 0.0
    %852 = vmatpush1.msra.mxu0 0.0
    %853 = vmatprep.subr.mxu0 0.0
    %854 = vmatpush1.msra.mxu0 0.0
    %855 = vmatprep.subr.mxu0 0.0
    %856 = vmatpush1.msra.mxu0 0.0
    %857 = vmatprep.mubr.f32.mxu0 0.0
    %858 = vmatmul.mubr.f32.gmra.mrb[0].mxu0 %v788
    %v859 = vpop.f32.mrb[0].mxu0
    %v860 = vadd.f32 0.0, %v859
    %v861 = vpop.f32.mrb[0].mxu0
    %862 = vmatprep.mubr.f32.mxu0 0.0
    %863 = vmatmul.mubr.f32.gmra.mrb[0].mxu0 %v791
    %v864 = vpop.f32.mrb[0].mxu0
    %v865 = vadd.f32 0.0, %v864
    %v866 = vpop.f32.mrb[0].mxu0
    %867 = vdwg.mxu0
    %868 = vrot.lane.b32.xlu0 %v236, 64
    %v869 = vpop.permute.xlu0 %868
    %870 = vrot.lane.b32.xlu0 %v241, 64
    %v871 = vpop.permute.xlu0 %870
    %872 = vrot.lane.b32.xlu0 %v344, 64
    %v873 = vpop.permute.xlu0 %872
    %874 = vrot.lane.b32.xlu0 %v349, 64
    %v875 = vpop.permute.xlu0 %874
    %v876 = vsel %vm474, %v869, 0
    %v878 = vsel %vm474, %v871, 0
    %v880 = vsel %vm474, %v873, 0
    %v882 = vsel %vm474, %v875, 0
    %884 = vmatprep.subr.mxu0 0.0
    %885 = vmatpush1.xpose.msra.mxu0 %v880
    %886 = vmatprep.subr.mxu0 0.0
    %887 = vmatpush1.xpose.msra.mxu0 %v882
    %888 = vmatprep.subr.mxu0 0.0
    %889 = vmatpush1.xpose.msra.mxu0 0.0
    %890 = vmatprep.subr.mxu0 0.0
    %891 = vmatpush1.xpose.msra.mxu0 0.0
    %892 = vmatprep.subr.mxu0 0.0
    %893 = vmatpush1.xpose.msra.mxu0 0.0
    %894 = vmatprep.subr.mxu0 0.0
    %895 = vmatpush1.xpose.msra.mxu0 0.0
    %896 = vmatprep.subr.mxu0 0.0
    %897 = vmatpush1.xpose.msra.mxu0 0.0
    %898 = vmatprep.subr.mxu0 0.0
    %899 = vmatpush1.xpose.msra.mxu0 0.0
    %900 = vmatprep.subr.mxu0 0.0
    %901 = vmatpush1.xpose.msra.mxu0 0.0
    %902 = vmatprep.subr.mxu0 0.0
    %903 = vmatpush1.xpose.msra.mxu0 0.0
    %904 = vmatprep.subr.mxu0 0.0
    %905 = vmatpush1.xpose.msra.mxu0 0.0
    %906 = vmatprep.subr.mxu0 0.0
    %907 = vmatpush1.xpose.msra.mxu0 0.0
    %908 = vmatprep.subr.mxu0 0.0
    %909 = vmatpush1.xpose.msra.mxu0 0.0
    %910 = vmatprep.subr.mxu0 0.0
    %911 = vmatpush1.xpose.msra.mxu0 0.0
    %912 = vmatprep.subr.mxu0 0.0
    %913 = vmatpush1.xpose.msra.mxu0 0.0
    %914 = vmatprep.subr.mxu0 0.0
    %915 = vmatpush1.xpose.msra.mxu0 0.0
    %916 = vmatprep.subr.mxu0 0.0
    %917 = vmatpush1.xpose.msra.mxu0 0.0
    %918 = vmatprep.subr.mxu0 0.0
    %919 = vmatpush1.xpose.msra.mxu0 0.0
    %920 = vmatprep.subr.mxu0 0.0
    %921 = vmatpush1.xpose.msra.mxu0 0.0
    %922 = vmatprep.subr.mxu0 0.0
    %923 = vmatpush1.xpose.msra.mxu0 0.0
    %924 = vmatprep.subr.mxu0 0.0
    %925 = vmatpush1.xpose.msra.mxu0 0.0
    %926 = vmatprep.subr.mxu0 0.0
    %927 = vmatpush1.xpose.msra.mxu0 0.0
    %928 = vmatprep.subr.mxu0 0.0
    %929 = vmatpush1.xpose.msra.mxu0 0.0
    %930 = vmatprep.subr.mxu0 0.0
    %931 = vmatpush1.xpose.msra.mxu0 0.0
    %932 = vmatprep.subr.mxu0 0.0
    %933 = vmatpush1.xpose.msra.mxu0 0.0
    %934 = vmatprep.subr.mxu0 0.0
    %935 = vmatpush1.xpose.msra.mxu0 0.0
    %936 = vmatprep.subr.mxu0 0.0
    %937 = vmatpush1.xpose.msra.mxu0 0.0
    %938 = vmatprep.subr.mxu0 0.0
    %939 = vmatpush1.xpose.msra.mxu0 0.0
    %940 = vmatprep.subr.mxu0 0.0
    %941 = vmatpush1.xpose.msra.mxu0 0.0
    %942 = vmatprep.subr.mxu0 0.0
    %943 = vmatpush1.xpose.msra.mxu0 0.0
    %944 = vmatprep.subr.mxu0 0.0
    %945 = vmatpush1.xpose.msra.mxu0 0.0
    %946 = vmatprep.subr.mxu0 0.0
    %947 = vmatpush1.xpose.msra.mxu0 0.0
    %948 = vmatprep.mubr.f32.mxu0 0.0
    %949 = vmatmul.mubr.f32.gmra.mrb[0].mxu0 %v876
    %v950 = vpop.f32.mrb[0].mxu0
    %v951 = vadd.f32 %v473, %v950
    %v952 = vpop.f32.mrb[0].mxu0
    %953 = vmatprep.mubr.f32.mxu0 0.0
    %954 = vmatmul.mubr.f32.gmra.mrb[0].mxu0 %v878
    %v955 = vpop.f32.mrb[0].mxu0
    %v956 = vadd.f32 %v473, %v955
    %v957 = vpop.f32.mrb[0].mxu0
    %958 = vdwg.mxu0
    %v959 = vsel %vm562, %v951, -inf
    %960 = vmax.xlane.f32.xlu0 %v959
    %v961 = vpop.xlane.xlu0 %960
    %v962 = vsel %vm562, %v956, -inf
    %963 = vmax.xlane.f32.xlu0 %v962
    %v964 = vpop.xlane.xlu0 %963
    %v965 = vsub.f32 %v951, %v961
    %v966 = vsub.f32 %v956, %v964
    %v967 = vmul.f32 %v965, 1.442695
    %v968 = vpow.pop %v967
    %v969 = vmul.f32 %v966, 1.442695
    %v970 = vpow.pop %v969
    %v971 = vsel %vm562, %v968, 0.0
    %972 = vadd.xlane.f32.xlu0 %v971
    %v973 = vpop.xlane.xlu0 %972
    %v974 = vsel %vm562, %v970, 0.0
    %975 = vadd.xlane.f32.xlu0 %v974
    %v976 = vpop.xlane.xlu0 %975
    %v977 = vrcp.pop %v973
    %v978 = vrcp.pop %v976
    %v979 = vmul.f32 %v968, %v977
    %v980 = vmul.f32 %v970, %v978
    %981 = vrot.lane.b32.xlu0 %v452, 64
    %v982 = vpop.permute.xlu0 %981
    %983 = vrot.lane.b32.xlu0 %v457, 64
    %v984 = vpop.permute.xlu0 %983
    %v988 = vsel %vm562, %v979, 0
    %v991 = vsel %vm562, %v980, 0
    %993 = vmatprep.subr.mxu0 0.0
    %994 = vmatpush1.msra.mxu0 %v982
    %995 = vmatprep.subr.mxu0 0.0
    %996 = vmatpush1.msra.mxu0 %v984
    %997 = vmatprep.subr.mxu0 0.0
    %998 = vmatpush1.msra.mxu0 0.0
    %999 = vmatprep.subr.mxu0 0.0
    %1000 = vmatpush1.msra.mxu0 0.0
    %1001 = vmatprep.subr.mxu0 0.0
    %1002 = vmatpush1.msra.mxu0 0.0
    %1003 = vmatprep.subr.mxu0 0.0
    %1004 = vmatpush1.msra.mxu0 0.0
    %1005 = vmatprep.subr.mxu0 0.0
    %1006 = vmatpush1.msra.mxu0 0.0
    %1007 = vmatprep.subr.mxu0 0.0
    %1008 = vmatpush1.msra.mxu0 0.0
    %1009 = vmatprep.subr.mxu0 0.0
    %1010 = vmatpush1.msra.mxu0 0.0
    %1011 = vmatprep.subr.mxu0 0.0
    %1012 = vmatpush1.msra.mxu0 0.0
    %1013 = vmatprep.subr.mxu0 0.0
    %1014 = vmatpush1.msra.mxu0 0.0
    %1015 = vmatprep.subr.mxu0 0.0
    %1016 = vmatpush1.msra.mxu0 0.0
    %1017 = vmatprep.subr.mxu0 0.0
    %1018 = vmatpush1.msra.mxu0 0.0
    %1019 = vmatprep.subr.mxu0 0.0
    %1020 = vmatpush1.msra.mxu0 0.0
    %1021 = vmatprep.subr.mxu0 0.0
    %1022 = vmatpush1.msra.mxu0 0.0
    %1023 = vmatprep.subr.mxu0 0.0
    %1024 = vmatpush1.msra.mxu0 0.0
    %1025 = vmatprep.subr.mxu0 0.0
    %1026 = vmatpush1.msra.mxu0 0.0
    %1027 = vmatprep.subr.mxu0 0.0
    %1028 = vmatpush1.msra.mxu0 0.0
    %1029 = vmatprep.subr.mxu0 0.0
    %1030 = vmatpush1.msra.mxu0 0.0
    %1031 = vmatprep.subr.mxu0 0.0
    %1032 = vmatpush1.msra.mxu0 0.0
    %1033 = vmatprep.subr.mxu0 0.0
    %1034 = vmatpush1.msra.mxu0 0.0
    %1035 = vmatprep.subr.mxu0 0.0
    %1036 = vmatpush1.msra.mxu0 0.0
    %1037 = vmatprep.subr.mxu0 0.0
    %1038 = vmatpush1.msra.mxu0 0.0
    %1039 = vmatprep.subr.mxu0 0.0
    %1040 = vmatpush1.msra.mxu0 0.0
    %1041 = vmatprep.subr.mxu0 0.0
    %1042 = vmatpush1.msra.mxu0 0.0
    %1043 = vmatprep.subr.mxu0 0.0
    %1044 = vmatpush1.msra.mxu0 0.0
    %1045 = vmatprep.subr.mxu0 0.0
    %1046 = vmatpush1.msra.mxu0 0.0
    %1047 = vmatprep.subr.mxu0 0.0
    %1048 = vmatpush1.msra.mxu0 0.0
    %1049 = vmatprep.subr.mxu0 0.0
    %1050 = vmatpush1.msra.mxu0 0.0
    %1051 = vmatprep.subr.mxu0 0.0
    %1052 = vmatpush1.msra.mxu0 0.0
    %1053 = vmatprep.subr.mxu0 0.0
    %1054 = vmatpush1.msra.mxu0 0.0
    %1055 = vmatprep.subr.mxu0 0.0
    %1056 = vmatpush1.msra.mxu0 0.0
    %1057 = vmatprep.mubr.f32.mxu0 0.0
    %1058 = vmatmul.mubr.f32.gmra.mrb[0].mxu0 %v988
    %v1059 = vpop.f32.mrb[0].mxu0
    %v1060 = vadd.f32 0.0, %v1059
    %v1061 = vpop.f32.mrb[0].mxu0
    %1062 = vmatprep.mubr.f32.mxu0 0.0
    %1063 = vmatmul.mubr.f32.gmra.mrb[0].mxu0 %v991
    %v1064 = vpop.f32.mrb[0].mxu0
    %v1065 = vadd.f32 0.0, %v1064
    %v1066 = vpop.f32.mrb[0].mxu0
    %1067 = vdwg.mxu0
    %1068 = vrot.lane.b32.xlu0 %v236, 32
    %v1069 = vpop.permute.xlu0 %1068
    %1070 = vrot.lane.b32.xlu0 %v241, 32
    %v1071 = vpop.permute.xlu0 %1070
    %1072 = vrot.lane.b32.xlu0 %v344, 32
    %v1073 = vpop.permute.xlu0 %1072
    %1074 = vrot.lane.b32.xlu0 %v349, 32
    %v1075 = vpop.permute.xlu0 %1074
    %v1076 = vsel %vm474, %v1069, 0
    %v1078 = vsel %vm474, %v1071, 0
    %v1080 = vsel %vm474, %v1073, 0
    %v1082 = vsel %vm474, %v1075, 0
    %1084 = vmatprep.subr.mxu0 0.0
    %1085 = vmatpush1.xpose.msra.mxu0 %v1080
    %1086 = vmatprep.subr.mxu0 0.0
    %1087 = vmatpush1.xpose.msra.mxu0 %v1082
    %1088 = vmatprep.subr.mxu0 0.0
    %1089 = vmatpush1.xpose.msra.mxu0 0.0
    %1090 = vmatprep.subr.mxu0 0.0
    %1091 = vmatpush1.xpose.msra.mxu0 0.0
    %1092 = vmatprep.subr.mxu0 0.0
    %1093 = vmatpush1.xpose.msra.mxu0 0.0
    %1094 = vmatprep.subr.mxu0 0.0
    %1095 = vmatpush1.xpose.msra.mxu0 0.0
    %1096 = vmatprep.subr.mxu0 0.0
    %1097 = vmatpush1.xpose.msra.mxu0 0.0
    %1098 = vmatprep.subr.mxu0 0.0
    %1099 = vmatpush1.xpose.msra.mxu0 0.0
    %1100 = vmatprep.subr.mxu0 0.0
    %1101 = vmatpush1.xpose.msra.mxu0 0.0
    %1102 = vmatprep.subr.mxu0 0.0
    %1103 = vmatpush1.xpose.msra.mxu0 0.0
    %1104 = vmatprep.subr.mxu0 0.0
    %1105 = vmatpush1.xpose.msra.mxu0 0.0
    %1106 = vmatprep.subr.mxu0 0.0
    %1107 = vmatpush1.xpose.msra.mxu0 0.0
    %1108 = vmatprep.subr.mxu0 0.0
    %1109 = vmatpush1.xpose.msra.mxu0 0.0
    %1110 = vmatprep.subr.mxu0 0.0
    %1111 = vmatpush1.xpose.msra.mxu0 0.0
    %1112 = vmatprep.subr.mxu0 0.0
    %1113 = vmatpush1.xpose.msra.mxu0 0.0
    %1114 = vmatprep.subr.mxu0 0.0
    %1115 = vmatpush1.xpose.msra.mxu0 0.0
    %1116 = vmatprep.subr.mxu0 0.0
    %1117 = vmatpush1.xpose.msra.mxu0 0.0
    %1118 = vmatprep.subr.mxu0 0.0
    %1119 = vmatpush1.xpose.msra.mxu0 0.0
    %1120 = vmatprep.subr.mxu0 0.0
    %1121 = vmatpush1.xpose.msra.mxu0 0.0
    %1122 = vmatprep.subr.mxu0 0.0
    %1123 = vmatpush1.xpose.msra.mxu0 0.0
    %1124 = vmatprep.subr.mxu0 0.0
    %1125 = vmatpush1.xpose.msra.mxu0 0.0
    %1126 = vmatprep.subr.mxu0 0.0
    %1127 = vmatpush1.xpose.msra.mxu0 0.0
    %1128 = vmatprep.subr.mxu0 0.0
    %1129 = vmatpush1.xpose.msra.mxu0 0.0
    %1130 = vmatprep.subr.mxu0 0.0
    %1131 = vmatpush1.xpose.msra.mxu0 0.0
    %1132 = vmatprep.subr.mxu0 0.0
    %1133 = vmatpush1.xpose.msra.mxu0 0.0
    %1134 = vmatprep.subr.mxu0 0.0
    %1135 = vmatpush1.xpose.msra.mxu0 0.0
    %1136 = vmatprep.subr.mxu0 0.0
    %1137 = vmatpush1.xpose.msra.mxu0 0.0
    %1138 = vmatprep.subr.mxu0 0.0
    %1139 = vmatpush1.xpose.msra.mxu0 0.0
    %1140 = vmatprep.subr.mxu0 0.0
    %1141 = vmatpush1.xpose.msra.mxu0 0.0
    %1142 = vmatprep.subr.mxu0 0.0
    %1143 = vmatpush1.xpose.msra.mxu0 0.0
    %1144 = vmatprep.subr.mxu0 0.0
    %1145 = vmatpush1.xpose.msra.mxu0 0.0
    %1146 = vmatprep.subr.mxu0 0.0
    %1147 = vmatpush1.xpose.msra.mxu0 0.0
    %1148 = vmatprep.mubr.f32.mxu0 0.0
    %1149 = vmatmul.mubr.f32.gmra.mrb[0].mxu0 %v1076
    %v1150 = vpop.f32.mrb[0].mxu0
    %v1151 = vadd.f32 %v473, %v1150
    %v1152 = vpop.f32.mrb[0].mxu0
    %1153 = vmatprep.mubr.f32.mxu0 0.0
    %1154 = vmatmul.mubr.f32.gmra.mrb[0].mxu0 %v1078
    %v1155 = vpop.f32.mrb[0].mxu0
    %v1156 = vadd.f32 %v473, %v1155
    %v1157 = vpop.f32.mrb[0].mxu0
    %1158 = vdwg.mxu0
    %v1159 = vsel %vm562, %v1151, -inf
    %1160 = vmax.xlane.f32.xlu0 %v1159
    %v1161 = vpop.xlane.xlu0 %1160
    %v1162 = vsel %vm562, %v1156, -inf
    %1163 = vmax.xlane.f32.xlu0 %v1162
    %v1164 = vpop.xlane.xlu0 %1163
    %v1165 = vsub.f32 %v1151, %v1161
    %v1166 = vsub.f32 %v1156, %v1164
    %v1167 = vmul.f32 %v1165, 1.442695
    %v1168 = vpow.pop %v1167
    %v1169 = vmul.f32 %v1166, 1.442695
    %v1170 = vpow.pop %v1169
    %v1171 = vsel %vm562, %v1168, 0.0
    %1172 = vadd.xlane.f32.xlu0 %v1171
    %v1173 = vpop.xlane.xlu0 %1172
    %v1174 = vsel %vm562, %v1170, 0.0
    %1175 = vadd.xlane.f32.xlu0 %v1174
    %v1176 = vpop.xlane.xlu0 %1175
    %v1177 = vrcp.pop %v1173
    %v1178 = vrcp.pop %v1176
    %v1179 = vmul.f32 %v1168, %v1177
    %v1180 = vmul.f32 %v1170, %v1178
    %1181 = vrot.lane.b32.xlu0 %v452, 32
    %v1182 = vpop.permute.xlu0 %1181
    %1183 = vrot.lane.b32.xlu0 %v457, 32
    %v1184 = vpop.permute.xlu0 %1183
    %v1188 = vsel %vm562, %v1179, 0
    %v1191 = vsel %vm562, %v1180, 0
    %1193 = vmatprep.subr.mxu0 0.0
    %1194 = vmatpush1.msra.mxu0 %v1182
    %1195 = vmatprep.subr.mxu0 0.0
    %1196 = vmatpush1.msra.mxu0 %v1184
    %1197 = vmatprep.subr.mxu0 0.0
    %1198 = vmatpush1.msra.mxu0 0.0
    %1199 = vmatprep.subr.mxu0 0.0
    %1200 = vmatpush1.msra.mxu0 0.0
    %1201 = vmatprep.subr.mxu0 0.0
    %1202 = vmatpush1.msra.mxu0 0.0
    %1203 = vmatprep.subr.mxu0 0.0
    %1204 = vmatpush1.msra.mxu0 0.0
    %1205 = vmatprep.subr.mxu0 0.0
    %1206 = vmatpush1.msra.mxu0 0.0
    %1207 = vmatprep.subr.mxu0 0.0
    %1208 = vmatpush1.msra.mxu0 0.0
    %1209 = vmatprep.subr.mxu0 0.0
    %1210 = vmatpush1.msra.mxu0 0.0
    %1211 = vmatprep.subr.mxu0 0.0
    %1212 = vmatpush1.msra.mxu0 0.0
    %1213 = vmatprep.subr.mxu0 0.0
    %1214 = vmatpush1.msra.mxu0 0.0
    %1215 = vmatprep.subr.mxu0 0.0
    %1216 = vmatpush1.msra.mxu0 0.0
    %1217 = vmatprep.subr.mxu0 0.0
    %1218 = vmatpush1.msra.mxu0 0.0
    %1219 = vmatprep.subr.mxu0 0.0
    %1220 = vmatpush1.msra.mxu0 0.0
    %1221 = vmatprep.subr.mxu0 0.0
    %1222 = vmatpush1.msra.mxu0 0.0
    %1223 = vmatprep.subr.mxu0 0.0
    %1224 = vmatpush1.msra.mxu0 0.0
    %1225 = vmatprep.subr.mxu0 0.0
    %1226 = vmatpush1.msra.mxu0 0.0
    %1227 = vmatprep.subr.mxu0 0.0
    %1228 = vmatpush1.msra.mxu0 0.0
    %1229 = vmatprep.subr.mxu0 0.0
    %1230 = vmatpush1.msra.mxu0 0.0
    %1231 = vmatprep.subr.mxu0 0.0
    %1232 = vmatpush1.msra.mxu0 0.0
    %1233 = vmatprep.subr.mxu0 0.0
    %1234 = vmatpush1.msra.mxu0 0.0
    %1235 = vmatprep.subr.mxu0 0.0
    %1236 = vmatpush1.msra.mxu0 0.0
    %1237 = vmatprep.subr.mxu0 0.0
    %1238 = vmatpush1.msra.mxu0 0.0
    %1239 = vmatprep.subr.mxu0 0.0
    %1240 = vmatpush1.msra.mxu0 0.0
    %1241 = vmatprep.subr.mxu0 0.0
    %1242 = vmatpush1.msra.mxu0 0.0
    %1243 = vmatprep.subr.mxu0 0.0
    %1244 = vmatpush1.msra.mxu0 0.0
    %1245 = vmatprep.subr.mxu0 0.0
    %1246 = vmatpush1.msra.mxu0 0.0
    %1247 = vmatprep.subr.mxu0 0.0
    %1248 = vmatpush1.msra.mxu0 0.0
    %1249 = vmatprep.subr.mxu0 0.0
    %1250 = vmatpush1.msra.mxu0 0.0
    %1251 = vmatprep.subr.mxu0 0.0
    %1252 = vmatpush1.msra.mxu0 0.0
    %1253 = vmatprep.subr.mxu0 0.0
    %1254 = vmatpush1.msra.mxu0 0.0
    %1255 = vmatprep.subr.mxu0 0.0
    %1256 = vmatpush1.msra.mxu0 0.0
    %1257 = vmatprep.mubr.f32.mxu0 0.0
    %1258 = vmatmul.mubr.f32.gmra.mrb[0].mxu0 %v1188
    %v1259 = vpop.f32.mrb[0].mxu0
    %v1260 = vadd.f32 0.0, %v1259
    %v1261 = vpop.f32.mrb[0].mxu0
    %1262 = vmatprep.mubr.f32.mxu0 0.0
    %1263 = vmatmul.mubr.f32.gmra.mrb[0].mxu0 %v1191
    %v1264 = vpop.f32.mrb[0].mxu0
    %v1265 = vadd.f32 0.0, %v1264
    %v1266 = vpop.f32.mrb[0].mxu0
    %1267 = vdwg.mxu0
    %1270 = vrot.lane.b32.xlu0 %v860, 32
    %v1271 = vpop.permute.xlu0 %1270
    %1272 = vrot.lane.b32.xlu0 %v865, 32
    %v1273 = vpop.permute.xlu0 %1272
    %1278 = vrot.lane.b32.xlu0 %v1060, 64
    %v1279 = vpop.permute.xlu0 %1278
    %1280 = vrot.lane.b32.xlu0 %v1065, 64
    %v1281 = vpop.permute.xlu0 %1280
    %1286 = vrot.lane.b32.xlu0 %v1260, 96
    %v1287 = vpop.permute.xlu0 %1286
    %1288 = vrot.lane.b32.xlu0 %v1265, 96
    %v1289 = vpop.permute.xlu0 %1288
    %v1292 = vsel %vm474, %v658, %v1271
    %v1293 = vsel %vm474, %v663, %v1273
    %vm1294 = vcmask 523264
    %v1295 = vsel %vm1294, %v1292, %v1279
    %v1296 = vsel %vm1294, %v1293, %v1281
    %vm1297 = vcmask 785408
    %v1298 = vsel %vm1297, %v1295, %v1287
    %v1299 = vsel %vm1297, %v1296, %v1289
    %v1301 = vsel %vm474, %v246, 0
    %v1304 = vsel %vm474, %v251, 0
    %v1307 = vsel %vm474, %v354, 0
    %v1310 = vsel %vm474, %v359, 0
    %1312 = vmatprep.subr.mxu0 0.0
    %1313 = vmatpush1.xpose.msra.mxu0 %v1307
    %1314 = vmatprep.subr.mxu0 0.0
    %1315 = vmatpush1.xpose.msra.mxu0 %v1310
    %1316 = vmatprep.subr.mxu0 0.0
    %1317 = vmatpush1.xpose.msra.mxu0 0.0
    %1318 = vmatprep.subr.mxu0 0.0
    %1319 = vmatpush1.xpose.msra.mxu0 0.0
    %1320 = vmatprep.subr.mxu0 0.0
    %1321 = vmatpush1.xpose.msra.mxu0 0.0
    %1322 = vmatprep.subr.mxu0 0.0
    %1323 = vmatpush1.xpose.msra.mxu0 0.0
    %1324 = vmatprep.subr.mxu0 0.0
    %1325 = vmatpush1.xpose.msra.mxu0 0.0
    %1326 = vmatprep.subr.mxu0 0.0
    %1327 = vmatpush1.xpose.msra.mxu0 0.0
    %1328 = vmatprep.subr.mxu0 0.0
    %1329 = vmatpush1.xpose.msra.mxu0 0.0
    %1330 = vmatprep.subr.mxu0 0.0
    %1331 = vmatpush1.xpose.msra.mxu0 0.0
    %1332 = vmatprep.subr.mxu0 0.0
    %1333 = vmatpush1.xpose.msra.mxu0 0.0
    %1334 = vmatprep.subr.mxu0 0.0
    %1335 = vmatpush1.xpose.msra.mxu0 0.0
    %1336 = vmatprep.subr.mxu0 0.0
    %1337 = vmatpush1.xpose.msra.mxu0 0.0
    %1338 = vmatprep.subr.mxu0 0.0
    %1339 = vmatpush1.xpose.msra.mxu0 0.0
    %1340 = vmatprep.subr.mxu0 0.0
    %1341 = vmatpush1.xpose.msra.mxu0 0.0
    %1342 = vmatprep.subr.mxu0 0.0
    %1343 = vmatpush1.xpose.msra.mxu0 0.0
    %1344 = vmatprep.subr.mxu0 0.0
    %1345 = vmatpush1.xpose.msra.mxu0 0.0
    %1346 = vmatprep.subr.mxu0 0.0
    %1347 = vmatpush1.xpose.msra.mxu0 0.0
    %1348 = vmatprep.subr.mxu0 0.0
    %1349 = vmatpush1.xpose.msra.mxu0 0.0
    %1350 = vmatprep.subr.mxu0 0.0
    %1351 = vmatpush1.xpose.msra.mxu0 0.0
    %1352 = vmatprep.subr.mxu0 0.0
    %1353 = vmatpush1.xpose.msra.mxu0 0.0
    %1354 = vmatprep.subr.mxu0 0.0
    %1355 = vmatpush1.xpose.msra.mxu0 0.0
    %1356 = vmatprep.subr.mxu0 0.0
    %1357 = vmatpush1.xpose.msra.mxu0 0.0
    %1358 = vmatprep.subr.mxu0 0.0
    %1359 = vmatpush1.xpose.msra.mxu0 0.0
    %1360 = vmatprep.subr.mxu0 0.0
    %1361 = vmatpush1.xpose.msra.mxu0 0.0
    %1362 = vmatprep.subr.mxu0 0.0
    %1363 = vmatpush1.xpose.msra.mxu0 0.0
    %1364 = vmatprep.subr.mxu0 0.0
    %1365 = vmatpush1.xpose.msra.mxu0 0.0
    %1366 = vmatprep.subr.mxu0 0.0
    %1367 = vmatpush1.xpose.msra.mxu0 0.0
    %1368 = vmatprep.subr.mxu0 0.0
    %1369 = vmatpush1.xpose.msra.mxu0 0.0
    %1370 = vmatprep.subr.mxu0 0.0
    %1371 = vmatpush1.xpose.msra.mxu0 0.0
    %1372 = vmatprep.subr.mxu0 0.0
    %1373 = vmatpush1.xpose.msra.mxu0 0.0
    %1374 = vmatprep.subr.mxu0 0.0
    %1375 = vmatpush1.xpose.msra.mxu0 0.0
    %1376 = vmatprep.mubr.f32.mxu0 0.0
    %1377 = vmatmul.mubr.f32.gmra.mrb[0].mxu0 %v1301
    %v1378 = vpop.f32.mrb[0].mxu0
    %v1379 = vadd.f32 %v473, %v1378
    %v1380 = vpop.f32.mrb[0].mxu0
    %1381 = vmatprep.mubr.f32.mxu0 0.0
    %1382 = vmatmul.mubr.f32.gmra.mrb[0].mxu0 %v1304
    %v1383 = vpop.f32.mrb[0].mxu0
    %v1384 = vadd.f32 %v473, %v1383
    %v1385 = vpop.f32.mrb[0].mxu0
    %1386 = vdwg.mxu0
    %v1387 = vsel %vm562, %v1379, -inf
    %1388 = vmax.xlane.f32.xlu0 %v1387
    %v1389 = vpop.xlane.xlu0 %1388
    %v1390 = vsel %vm562, %v1384, -inf
    %1391 = vmax.xlane.f32.xlu0 %v1390
    %v1392 = vpop.xlane.xlu0 %1391
    %v1393 = vsub.f32 %v1379, %v1389
    %v1394 = vsub.f32 %v1384, %v1392
    %v1395 = vmul.f32 %v1393, 1.442695
    %v1396 = vpow.pop %v1395
    %v1397 = vmul.f32 %v1394, 1.442695
    %v1398 = vpow.pop %v1397
    %v1399 = vsel %vm562, %v1396, 0.0
    %1400 = vadd.xlane.f32.xlu0 %v1399
    %v1401 = vpop.xlane.xlu0 %1400
    %v1402 = vsel %vm562, %v1398, 0.0
    %1403 = vadd.xlane.f32.xlu0 %v1402
    %v1404 = vpop.xlane.xlu0 %1403
    %v1405 = vrcp.pop %v1401
    %v1406 = vrcp.pop %v1404
    %v1407 = vmul.f32 %v1396, %v1405
    %v1408 = vmul.f32 %v1398, %v1406
    %v1410 = vsel %vm562, %v1407, 0
    %v1413 = vsel %vm562, %v1408, 0
    %1415 = vmatprep.subr.mxu0 0.0
    %1416 = vmatpush1.msra.mxu0 %v462
    %1417 = vmatprep.subr.mxu0 0.0
    %1418 = vmatpush1.msra.mxu0 %v467
    %1419 = vmatprep.subr.mxu0 0.0
    %1420 = vmatpush1.msra.mxu0 0.0
    %1421 = vmatprep.subr.mxu0 0.0
    %1422 = vmatpush1.msra.mxu0 0.0
    %1423 = vmatprep.subr.mxu0 0.0
    %1424 = vmatpush1.msra.mxu0 0.0
    %1425 = vmatprep.subr.mxu0 0.0
    %1426 = vmatpush1.msra.mxu0 0.0
    %1427 = vmatprep.subr.mxu0 0.0
    %1428 = vmatpush1.msra.mxu0 0.0
    %1429 = vmatprep.subr.mxu0 0.0
    %1430 = vmatpush1.msra.mxu0 0.0
    %1431 = vmatprep.subr.mxu0 0.0
    %1432 = vmatpush1.msra.mxu0 0.0
    %1433 = vmatprep.subr.mxu0 0.0
    %1434 = vmatpush1.msra.mxu0 0.0
    %1435 = vmatprep.subr.mxu0 0.0
    %1436 = vmatpush1.msra.mxu0 0.0
    %1437 = vmatprep.subr.mxu0 0.0
    %1438 = vmatpush1.msra.mxu0 0.0
    %1439 = vmatprep.subr.mxu0 0.0
    %1440 = vmatpush1.msra.mxu0 0.0
    %1441 = vmatprep.subr.mxu0 0.0
    %1442 = vmatpush1.msra.mxu0 0.0
    %1443 = vmatprep.subr.mxu0 0.0
    %1444 = vmatpush1.msra.mxu0 0.0
    %1445 = vmatprep.subr.mxu0 0.0
    %1446 = vmatpush1.msra.mxu0 0.0
    %1447 = vmatprep.subr.mxu0 0.0
    %1448 = vmatpush1.msra.mxu0 0.0
    %1449 = vmatprep.subr.mxu0 0.0
    %1450 = vmatpush1.msra.mxu0 0.0
    %1451 = vmatprep.subr.mxu0 0.0
    %1452 = vmatpush1.msra.mxu0 0.0
    %1453 = vmatprep.subr.mxu0 0.0
    %1454 = vmatpush1.msra.mxu0 0.0
    %1455 = vmatprep.subr.mxu0 0.0
    %1456 = vmatpush1.msra.mxu0 0.0
    %1457 = vmatprep.subr.mxu0 0.0
    %1458 = vmatpush1.msra.mxu0 0.0
    %1459 = vmatprep.subr.mxu0 0.0
    %1460 = vmatpush1.msra.mxu0 0.0
    %1461 = vmatprep.subr.mxu0 0.0
    %1462 = vmatpush1.msra.mxu0 0.0
    %1463 = vmatprep.subr.mxu0 0.0
    %1464 = vmatpush1.msra.mxu0 0.0
    %1465 = vmatprep.subr.mxu0 0.0
    %1466 = vmatpush1.msra.mxu0 0.0
    %1467 = vmatprep.subr.mxu0 0.0
    %1468 = vmatpush1.msra.mxu0 0.0
    %1469 = vmatprep.subr.mxu0 0.0
    %1470 = vmatpush1.msra.mxu0 0.0
    %1471 = vmatprep.subr.mxu0 0.0
    %1472 = vmatpush1.msra.mxu0 0.0
    %1473 = vmatprep.subr.mxu0 0.0
    %1474 = vmatpush1.msra.mxu0 0.0
    %1475 = vmatprep.subr.mxu0 0.0
    %1476 = vmatpush1.msra.mxu0 0.0
    %1477 = vmatprep.subr.mxu0 0.0
    %1478 = vmatpush1.msra.mxu0 0.0
    %1479 = vmatprep.mubr.f32.mxu0 0.0
    %1480 = vmatmul.mubr.f32.gmra.mrb[0].mxu0 %v1410
    %v1481 = vpop.f32.mrb[0].mxu0
    %v1482 = vadd.f32 0.0, %v1481
    %v1483 = vpop.f32.mrb[0].mxu0
    %1484 = vmatprep.mubr.f32.mxu0 0.0
    %1485 = vmatmul.mubr.f32.gmra.mrb[0].mxu0 %v1413
    %v1486 = vpop.f32.mrb[0].mxu0
    %v1487 = vadd.f32 0.0, %v1486
    %v1488 = vpop.f32.mrb[0].mxu0
    %1489 = vdwg.mxu0
    %1490 = vrot.lane.b32.xlu0 %v246, 96
    %v1491 = vpop.permute.xlu0 %1490
    %1492 = vrot.lane.b32.xlu0 %v251, 96
    %v1493 = vpop.permute.xlu0 %1492
    %1494 = vrot.lane.b32.xlu0 %v354, 96
    %v1495 = vpop.permute.xlu0 %1494
    %1496 = vrot.lane.b32.xlu0 %v359, 96
    %v1497 = vpop.permute.xlu0 %1496
    %v1498 = vsel %vm474, %v1491, 0
    %v1500 = vsel %vm474, %v1493, 0
    %v1502 = vsel %vm474, %v1495, 0
    %v1504 = vsel %vm474, %v1497, 0
    %1506 = vmatprep.subr.mxu0 0.0
    %1507 = vmatpush1.xpose.msra.mxu0 %v1502
    %1508 = vmatprep.subr.mxu0 0.0
    %1509 = vmatpush1.xpose.msra.mxu0 %v1504
    %1510 = vmatprep.subr.mxu0 0.0
    %1511 = vmatpush1.xpose.msra.mxu0 0.0
    %1512 = vmatprep.subr.mxu0 0.0
    %1513 = vmatpush1.xpose.msra.mxu0 0.0
    %1514 = vmatprep.subr.mxu0 0.0
    %1515 = vmatpush1.xpose.msra.mxu0 0.0
    %1516 = vmatprep.subr.mxu0 0.0
    %1517 = vmatpush1.xpose.msra.mxu0 0.0
    %1518 = vmatprep.subr.mxu0 0.0
    %1519 = vmatpush1.xpose.msra.mxu0 0.0
    %1520 = vmatprep.subr.mxu0 0.0
    %1521 = vmatpush1.xpose.msra.mxu0 0.0
    %1522 = vmatprep.subr.mxu0 0.0
    %1523 = vmatpush1.xpose.msra.mxu0 0.0
    %1524 = vmatprep.subr.mxu0 0.0
    %1525 = vmatpush1.xpose.msra.mxu0 0.0
    %1526 = vmatprep.subr.mxu0 0.0
    %1527 = vmatpush1.xpose.msra.mxu0 0.0
    %1528 = vmatprep.subr.mxu0 0.0
    %1529 = vmatpush1.xpose.msra.mxu0 0.0
    %1530 = vmatprep.subr.mxu0 0.0
    %1531 = vmatpush1.xpose.msra.mxu0 0.0
    %1532 = vmatprep.subr.mxu0 0.0
    %1533 = vmatpush1.xpose.msra.mxu0 0.0
    %1534 = vmatprep.subr.mxu0 0.0
    %1535 = vmatpush1.xpose.msra.mxu0 0.0
    %1536 = vmatprep.subr.mxu0 0.0
    %1537 = vmatpush1.xpose.msra.mxu0 0.0
    %1538 = vmatprep.subr.mxu0 0.0
    %1539 = vmatpush1.xpose.msra.mxu0 0.0
    %1540 = vmatprep.subr.mxu0 0.0
    %1541 = vmatpush1.xpose.msra.mxu0 0.0
    %1542 = vmatprep.subr.mxu0 0.0
    %1543 = vmatpush1.xpose.msra.mxu0 0.0
    %1544 = vmatprep.subr.mxu0 0.0
    %1545 = vmatpush1.xpose.msra.mxu0 0.0
    %1546 = vmatprep.subr.mxu0 0.0
    %1547 = vmatpush1.xpose.msra.mxu0 0.0
    %1548 = vmatprep.subr.mxu0 0.0
    %1549 = vmatpush1.xpose.msra.mxu0 0.0
    %1550 = vmatprep.subr.mxu0 0.0
    %1551 = vmatpush1.xpose.msra.mxu0 0.0
    %1552 = vmatprep.subr.mxu0 0.0
    %1553 = vmatpush1.xpose.msra.mxu0 0.0
    %1554 = vmatprep.subr.mxu0 0.0
    %1555 = vmatpush1.xpose.msra.mxu0 0.0
    %1556 = vmatprep.subr.mxu0 0.0
    %1557 = vmatpush1.xpose.msra.mxu0 0.0
    %1558 = vmatprep.subr.mxu0 0.0
    %1559 = vmatpush1.xpose.msra.mxu0 0.0
    %1560 = vmatprep.subr.mxu0 0.0
    %1561 = vmatpush1.xpose.msra.mxu0 0.0
    %1562 = vmatprep.subr.mxu0 0.0
    %1563 = vmatpush1.xpose.msra.mxu0 0.0
    %1564 = vmatprep.subr.mxu0 0.0
    %1565 = vmatpush1.xpose.msra.mxu0 0.0
    %1566 = vmatprep.subr.mxu0 0.0
    %1567 = vmatpush1.xpose.msra.mxu0 0.0
    %1568 = vmatprep.subr.mxu0 0.0
    %1569 = vmatpush1.xpose.msra.mxu0 0.0
    %1570 = vmatprep.mubr.f32.mxu0 0.0
    %1571 = vmatmul.mubr.f32.gmra.mrb[0].mxu0 %v1498
    %v1572 = vpop.f32.mrb[0].mxu0
    %v1573 = vadd.f32 %v473, %v1572
    %v1574 = vpop.f32.mrb[0].mxu0
    %1575 = vmatprep.mubr.f32.mxu0 0.0
    %1576 = vmatmul.mubr.f32.gmra.mrb[0].mxu0 %v1500
    %v1577 = vpop.f32.mrb[0].mxu0
    %v1578 = vadd.f32 %v473, %v1577
    %v1579 = vpop.f32.mrb[0].mxu0
    %1580 = vdwg.mxu0
    %v1581 = vsel %vm562, %v1573, -inf
    %1582 = vmax.xlane.f32.xlu0 %v1581
    %v1583 = vpop.xlane.xlu0 %1582
    %v1584 = vsel %vm562, %v1578, -inf
    %1585 = vmax.xlane.f32.xlu0 %v1584
    %v1586 = vpop.xlane.xlu0 %1585
    %v1587 = vsub.f32 %v1573, %v1583
    %v1588 = vsub.f32 %v1578, %v1586
    %v1589 = vmul.f32 %v1587, 1.442695
    %v1590 = vpow.pop %v1589
    %v1591 = vmul.f32 %v1588, 1.442695
    %v1592 = vpow.pop %v1591
    %v1593 = vsel %vm562, %v1590, 0.0
    %1594 = vadd.xlane.f32.xlu0 %v1593
    %v1595 = vpop.xlane.xlu0 %1594
    %v1596 = vsel %vm562, %v1592, 0.0
    %1597 = vadd.xlane.f32.xlu0 %v1596
    %v1598 = vpop.xlane.xlu0 %1597
    %v1599 = vrcp.pop %v1595
    %v1600 = vrcp.pop %v1598
    %v1601 = vmul.f32 %v1590, %v1599
    %v1602 = vmul.f32 %v1592, %v1600
    %1605 = vrot.lane.b32.xlu0 %v462, 96
    %v1606 = vpop.permute.xlu0 %1605
    %1607 = vrot.lane.b32.xlu0 %v467, 96
    %v1608 = vpop.permute.xlu0 %1607
    %v1612 = vsel %vm562, %v1601, 0
    %v1615 = vsel %vm562, %v1602, 0
    %1617 = vmatprep.subr.mxu0 0.0
    %1618 = vmatpush1.msra.mxu0 %v1606
    %1619 = vmatprep.subr.mxu0 0.0
    %1620 = vmatpush1.msra.mxu0 %v1608
    %1621 = vmatprep.subr.mxu0 0.0
    %1622 = vmatpush1.msra.mxu0 0.0
    %1623 = vmatprep.subr.mxu0 0.0
    %1624 = vmatpush1.msra.mxu0 0.0
    %1625 = vmatprep.subr.mxu0 0.0
    %1626 = vmatpush1.msra.mxu0 0.0
    %1627 = vmatprep.subr.mxu0 0.0
    %1628 = vmatpush1.msra.mxu0 0.0
    %1629 = vmatprep.subr.mxu0 0.0
    %1630 = vmatpush1.msra.mxu0 0.0
    %1631 = vmatprep.subr.mxu0 0.0
    %1632 = vmatpush1.msra.mxu0 0.0
    %1633 = vmatprep.subr.mxu0 0.0
    %1634 = vmatpush1.msra.mxu0 0.0
    %1635 = vmatprep.subr.mxu0 0.0
    %1636 = vmatpush1.msra.mxu0 0.0
    %1637 = vmatprep.subr.mxu0 0.0
    %1638 = vmatpush1.msra.mxu0 0.0
    %1639 = vmatprep.subr.mxu0 0.0
    %1640 = vmatpush1.msra.mxu0 0.0
    %1641 = vmatprep.subr.mxu0 0.0
    %1642 = vmatpush1.msra.mxu0 0.0
    %1643 = vmatprep.subr.mxu0 0.0
    %1644 = vmatpush1.msra.mxu0 0.0
    %1645 = vmatprep.subr.mxu0 0.0
    %1646 = vmatpush1.msra.mxu0 0.0
    %1647 = vmatprep.subr.mxu0 0.0
    %1648 = vmatpush1.msra.mxu0 0.0
    %1649 = vmatprep.subr.mxu0 0.0
    %1650 = vmatpush1.msra.mxu0 0.0
    %1651 = vmatprep.subr.mxu0 0.0
    %1652 = vmatpush1.msra.mxu0 0.0
    %1653 = vmatprep.subr.mxu0 0.0
    %1654 = vmatpush1.msra.mxu0 0.0
    %1655 = vmatprep.subr.mxu0 0.0
    %1656 = vmatpush1.msra.mxu0 0.0
    %1657 = vmatprep.subr.mxu0 0.0
    %1658 = vmatpush1.msra.mxu0 0.0
    %1659 = vmatprep.subr.mxu0 0.0
    %1660 = vmatpush1.msra.mxu0 0.0
    %1661 = vmatprep.subr.mxu0 0.0
    %1662 = vmatpush1.msra.mxu0 0.0
    %1663 = vmatprep.subr.mxu0 0.0
    %1664 = vmatpush1.msra.mxu0 0.0
    %1665 = vmatprep.subr.mxu0 0.0
    %1666 = vmatpush1.msra.mxu0 0.0
    %1667 = vmatprep.subr.mxu0 0.0
    %1668 = vmatpush1.msra.mxu0 0.0
    %1669 = vmatprep.subr.mxu0 0.0
    %1670 = vmatpush1.msra.mxu0 0.0
    %1671 = vmatprep.subr.mxu0 0.0
    %1672 = vmatpush1.msra.mxu0 0.0
    %1673 = vmatprep.subr.mxu0 0.0
    %1674 = vmatpush1.msra.mxu0 0.0
    %1675 = vmatprep.subr.mxu0 0.0
    %1676 = vmatpush1.msra.mxu0 0.0
    %1677 = vmatprep.subr.mxu0 0.0
    %1678 = vmatpush1.msra.mxu0 0.0
    %1679 = vmatprep.subr.mxu0 0.0
    %1680 = vmatpush1.msra.mxu0 0.0
    %1681 = vmatprep.mubr.f32.mxu0 0.0
    %1682 = vmatmul.mubr.f32.gmra.mrb[0].mxu0 %v1612
    %v1683 = vpop.f32.mrb[0].mxu0
    %v1684 = vadd.f32 0.0, %v1683
    %v1685 = vpop.f32.mrb[0].mxu0
    %1686 = vmatprep.mubr.f32.mxu0 0.0
    %1687 = vmatmul.mubr.f32.gmra.mrb[0].mxu0 %v1615
    %v1688 = vpop.f32.mrb[0].mxu0
    %v1689 = vadd.f32 0.0, %v1688
    %v1690 = vpop.f32.mrb[0].mxu0
    %1691 = vdwg.mxu0
    %1692 = vrot.lane.b32.xlu0 %v246, 64
    %v1693 = vpop.permute.xlu0 %1692
    %1694 = vrot.lane.b32.xlu0 %v251, 64
    %v1695 = vpop.permute.xlu0 %1694
    %1696 = vrot.lane.b32.xlu0 %v354, 64
    %v1697 = vpop.permute.xlu0 %1696
    %1698 = vrot.lane.b32.xlu0 %v359, 64
    %v1699 = vpop.permute.xlu0 %1698
    %v1700 = vsel %vm474, %v1693, 0
    %v1702 = vsel %vm474, %v1695, 0
    %v1704 = vsel %vm474, %v1697, 0
    %v1706 = vsel %vm474, %v1699, 0
    %1708 = vmatprep.subr.mxu0 0.0
    %1709 = vmatpush1.xpose.msra.mxu0 %v1704
    %1710 = vmatprep.subr.mxu0 0.0
    %1711 = vmatpush1.xpose.msra.mxu0 %v1706
    %1712 = vmatprep.subr.mxu0 0.0
    %1713 = vmatpush1.xpose.msra.mxu0 0.0
    %1714 = vmatprep.subr.mxu0 0.0
    %1715 = vmatpush1.xpose.msra.mxu0 0.0
    %1716 = vmatprep.subr.mxu0 0.0
    %1717 = vmatpush1.xpose.msra.mxu0 0.0
    %1718 = vmatprep.subr.mxu0 0.0
    %1719 = vmatpush1.xpose.msra.mxu0 0.0
    %1720 = vmatprep.subr.mxu0 0.0
    %1721 = vmatpush1.xpose.msra.mxu0 0.0
    %1722 = vmatprep.subr.mxu0 0.0
    %1723 = vmatpush1.xpose.msra.mxu0 0.0
    %1724 = vmatprep.subr.mxu0 0.0
    %1725 = vmatpush1.xpose.msra.mxu0 0.0
    %1726 = vmatprep.subr.mxu0 0.0
    %1727 = vmatpush1.xpose.msra.mxu0 0.0
    %1728 = vmatprep.subr.mxu0 0.0
    %1729 = vmatpush1.xpose.msra.mxu0 0.0
    %1730 = vmatprep.subr.mxu0 0.0
    %1731 = vmatpush1.xpose.msra.mxu0 0.0
    %1732 = vmatprep.subr.mxu0 0.0
    %1733 = vmatpush1.xpose.msra.mxu0 0.0
    %1734 = vmatprep.subr.mxu0 0.0
    %1735 = vmatpush1.xpose.msra.mxu0 0.0
    %1736 = vmatprep.subr.mxu0 0.0
    %1737 = vmatpush1.xpose.msra.mxu0 0.0
    %1738 = vmatprep.subr.mxu0 0.0
    %1739 = vmatpush1.xpose.msra.mxu0 0.0
    %1740 = vmatprep.subr.mxu0 0.0
    %1741 = vmatpush1.xpose.msra.mxu0 0.0
    %1742 = vmatprep.subr.mxu0 0.0
    %1743 = vmatpush1.xpose.msra.mxu0 0.0
    %1744 = vmatprep.subr.mxu0 0.0
    %1745 = vmatpush1.xpose.msra.mxu0 0.0
    %1746 = vmatprep.subr.mxu0 0.0
    %1747 = vmatpush1.xpose.msra.mxu0 0.0
    %1748 = vmatprep.subr.mxu0 0.0
    %1749 = vmatpush1.xpose.msra.mxu0 0.0
    %1750 = vmatprep.subr.mxu0 0.0
    %1751 = vmatpush1.xpose.msra.mxu0 0.0
    %1752 = vmatprep.subr.mxu0 0.0
    %1753 = vmatpush1.xpose.msra.mxu0 0.0
    %1754 = vmatprep.subr.mxu0 0.0
    %1755 = vmatpush1.xpose.msra.mxu0 0.0
    %1756 = vmatprep.subr.mxu0 0.0
    %1757 = vmatpush1.xpose.msra.mxu0 0.0
    %1758 = vmatprep.subr.mxu0 0.0
    %1759 = vmatpush1.xpose.msra.mxu0 0.0
    %1760 = vmatprep.subr.mxu0 0.0
    %1761 = vmatpush1.xpose.msra.mxu0 0.0
    %1762 = vmatprep.subr.mxu0 0.0
    %1763 = vmatpush1.xpose.msra.mxu0 0.0
    %1764 = vmatprep.subr.mxu0 0.0
    %1765 = vmatpush1.xpose.msra.mxu0 0.0
    %1766 = vmatprep.subr.mxu0 0.0
    %1767 = vmatpush1.xpose.msra.mxu0 0.0
    %1768 = vmatprep.subr.mxu0 0.0
    %1769 = vmatpush1.xpose.msra.mxu0 0.0
    %1770 = vmatprep.subr.mxu0 0.0
    %1771 = vmatpush1.xpose.msra.mxu0 0.0
    %1772 = vmatprep.mubr.f32.mxu0 0.0
    %1773 = vmatmul.mubr.f32.gmra.mrb[0].mxu0 %v1700
    %v1774 = vpop.f32.mrb[0].mxu0
    %v1775 = vadd.f32 %v473, %v1774
    %v1776 = vpop.f32.mrb[0].mxu0
    %1777 = vmatprep.mubr.f32.mxu0 0.0
    %1778 = vmatmul.mubr.f32.gmra.mrb[0].mxu0 %v1702
    %v1779 = vpop.f32.mrb[0].mxu0
    %v1780 = vadd.f32 %v473, %v1779
    %v1781 = vpop.f32.mrb[0].mxu0
    %1782 = vdwg.mxu0
    %v1783 = vsel %vm562, %v1775, -inf
    %1784 = vmax.xlane.f32.xlu0 %v1783
    %v1785 = vpop.xlane.xlu0 %1784
    %v1786 = vsel %vm562, %v1780, -inf
    %1787 = vmax.xlane.f32.xlu0 %v1786
    %v1788 = vpop.xlane.xlu0 %1787
    %v1789 = vsub.f32 %v1775, %v1785
    %v1790 = vsub.f32 %v1780, %v1788
    %v1791 = vmul.f32 %v1789, 1.442695
    %v1792 = vpow.pop %v1791
    %v1793 = vmul.f32 %v1790, 1.442695
    %v1794 = vpow.pop %v1793
    %v1795 = vsel %vm562, %v1792, 0.0
    %1796 = vadd.xlane.f32.xlu0 %v1795
    %v1797 = vpop.xlane.xlu0 %1796
    %v1798 = vsel %vm562, %v1794, 0.0
    %1799 = vadd.xlane.f32.xlu0 %v1798
    %v1800 = vpop.xlane.xlu0 %1799
    %v1801 = vrcp.pop %v1797
    %v1802 = vrcp.pop %v1800
    %v1803 = vmul.f32 %v1792, %v1801
    %v1804 = vmul.f32 %v1794, %v1802
    %1805 = vrot.lane.b32.xlu0 %v462, 64
    %v1806 = vpop.permute.xlu0 %1805
    %1807 = vrot.lane.b32.xlu0 %v467, 64
    %v1808 = vpop.permute.xlu0 %1807
    %v1812 = vsel %vm562, %v1803, 0
    %v1815 = vsel %vm562, %v1804, 0
    %1817 = vmatprep.subr.mxu0 0.0
    %1818 = vmatpush1.msra.mxu0 %v1806
    %1819 = vmatprep.subr.mxu0 0.0
    %1820 = vmatpush1.msra.mxu0 %v1808
    %1821 = vmatprep.subr.mxu0 0.0
    %1822 = vmatpush1.msra.mxu0 0.0
    %1823 = vmatprep.subr.mxu0 0.0
    %1824 = vmatpush1.msra.mxu0 0.0
    %1825 = vmatprep.subr.mxu0 0.0
    %1826 = vmatpush1.msra.mxu0 0.0
    %1827 = vmatprep.subr.mxu0 0.0
    %1828 = vmatpush1.msra.mxu0 0.0
    %1829 = vmatprep.subr.mxu0 0.0
    %1830 = vmatpush1.msra.mxu0 0.0
    %1831 = vmatprep.subr.mxu0 0.0
    %1832 = vmatpush1.msra.mxu0 0.0
    %1833 = vmatprep.subr.mxu0 0.0
    %1834 = vmatpush1.msra.mxu0 0.0
    %1835 = vmatprep.subr.mxu0 0.0
    %1836 = vmatpush1.msra.mxu0 0.0
    %1837 = vmatprep.subr.mxu0 0.0
    %1838 = vmatpush1.msra.mxu0 0.0
    %1839 = vmatprep.subr.mxu0 0.0
    %1840 = vmatpush1.msra.mxu0 0.0
    %1841 = vmatprep.subr.mxu0 0.0
    %1842 = vmatpush1.msra.mxu0 0.0
    %1843 = vmatprep.subr.mxu0 0.0
    %1844 = vmatpush1.msra.mxu0 0.0
    %1845 = vmatprep.subr.mxu0 0.0
    %1846 = vmatpush1.msra.mxu0 0.0
    %1847 = vmatprep.subr.mxu0 0.0
    %1848 = vmatpush1.msra.mxu0 0.0
    %1849 = vmatprep.subr.mxu0 0.0
    %1850 = vmatpush1.msra.mxu0 0.0
    %1851 = vmatprep.subr.mxu0 0.0
    %1852 = vmatpush1.msra.mxu0 0.0
    %1853 = vmatprep.subr.mxu0 0.0
    %1854 = vmatpush1.msra.mxu0 0.0
    %1855 = vmatprep.subr.mxu0 0.0
    %1856 = vmatpush1.msra.mxu0 0.0
    %1857 = vmatprep.subr.mxu0 0.0
    %1858 = vmatpush1.msra.mxu0 0.0
    %1859 = vmatprep.subr.mxu0 0.0
    %1860 = vmatpush1.msra.mxu0 0.0
    %1861 = vmatprep.subr.mxu0 0.0
    %1862 = vmatpush1.msra.mxu0 0.0
    %1863 = vmatprep.subr.mxu0 0.0
    %1864 = vmatpush1.msra.mxu0 0.0
    %1865 = vmatprep.subr.mxu0 0.0
    %1866 = vmatpush1.msra.mxu0 0.0
    %1867 = vmatprep.subr.mxu0 0.0
    %1868 = vmatpush1.msra.mxu0 0.0
    %1869 = vmatprep.subr.mxu0 0.0
    %1870 = vmatpush1.msra.mxu0 0.0
    %1871 = vmatprep.subr.mxu0 0.0
    %1872 = vmatpush1.msra.mxu0 0.0
    %1873 = vmatprep.subr.mxu0 0.0
    %1874 = vmatpush1.msra.mxu0 0.0
    %1875 = vmatprep.subr.mxu0 0.0
    %1876 = vmatpush1.msra.mxu0 0.0
    %1877 = vmatprep.subr.mxu0 0.0
    %1878 = vmatpush1.msra.mxu0 0.0
    %1879 = vmatprep.subr.mxu0 0.0
    %1880 = vmatpush1.msra.mxu0 0.0
    %1881 = vmatprep.mubr.f32.mxu0 0.0
    %1882 = vmatmul.mubr.f32.gmra.mrb[0].mxu0 %v1812
    %v1883 = vpop.f32.mrb[0].mxu0
    %v1884 = vadd.f32 0.0, %v1883
    %v1885 = vpop.f32.mrb[0].mxu0
    %1886 = vmatprep.mubr.f32.mxu0 0.0
    %1887 = vmatmul.mubr.f32.gmra.mrb[0].mxu0 %v1815
    %v1888 = vpop.f32.mrb[0].mxu0
    %v1889 = vadd.f32 0.0, %v1888
    %v1890 = vpop.f32.mrb[0].mxu0
    %1891 = vdwg.mxu0
    %1892 = vrot.lane.b32.xlu0 %v246, 32
    %v1893 = vpop.permute.xlu0 %1892
    %1894 = vrot.lane.b32.xlu0 %v251, 32
    %v1895 = vpop.permute.xlu0 %1894
    %1896 = vrot.lane.b32.xlu0 %v354, 32
    %v1897 = vpop.permute.xlu0 %1896
    %1898 = vrot.lane.b32.xlu0 %v359, 32
    %v1899 = vpop.permute.xlu0 %1898
    %v1900 = vsel %vm474, %v1893, 0
    %v1902 = vsel %vm474, %v1895, 0
    %v1904 = vsel %vm474, %v1897, 0
    %v1906 = vsel %vm474, %v1899, 0
    %1908 = vmatprep.subr.mxu0 0.0
    %1909 = vmatpush1.xpose.msra.mxu0 %v1904
    %1910 = vmatprep.subr.mxu0 0.0
    %1911 = vmatpush1.xpose.msra.mxu0 %v1906
    %1912 = vmatprep.subr.mxu0 0.0
    %1913 = vmatpush1.xpose.msra.mxu0 0.0
    %1914 = vmatprep.subr.mxu0 0.0
    %1915 = vmatpush1.xpose.msra.mxu0 0.0
    %1916 = vmatprep.subr.mxu0 0.0
    %1917 = vmatpush1.xpose.msra.mxu0 0.0
    %1918 = vmatprep.subr.mxu0 0.0
    %1919 = vmatpush1.xpose.msra.mxu0 0.0
    %1920 = vmatprep.subr.mxu0 0.0
    %1921 = vmatpush1.xpose.msra.mxu0 0.0
    %1922 = vmatprep.subr.mxu0 0.0
    %1923 = vmatpush1.xpose.msra.mxu0 0.0
    %1924 = vmatprep.subr.mxu0 0.0
    %1925 = vmatpush1.xpose.msra.mxu0 0.0
    %1926 = vmatprep.subr.mxu0 0.0
    %1927 = vmatpush1.xpose.msra.mxu0 0.0
    %1928 = vmatprep.subr.mxu0 0.0
    %1929 = vmatpush1.xpose.msra.mxu0 0.0
    %1930 = vmatprep.subr.mxu0 0.0
    %1931 = vmatpush1.xpose.msra.mxu0 0.0
    %1932 = vmatprep.subr.mxu0 0.0
    %1933 = vmatpush1.xpose.msra.mxu0 0.0
    %1934 = vmatprep.subr.mxu0 0.0
    %1935 = vmatpush1.xpose.msra.mxu0 0.0
    %1936 = vmatprep.subr.mxu0 0.0
    %1937 = vmatpush1.xpose.msra.mxu0 0.0
    %1938 = vmatprep.subr.mxu0 0.0
    %1939 = vmatpush1.xpose.msra.mxu0 0.0
    %1940 = vmatprep.subr.mxu0 0.0
    %1941 = vmatpush1.xpose.msra.mxu0 0.0
    %1942 = vmatprep.subr.mxu0 0.0
    %1943 = vmatpush1.xpose.msra.mxu0 0.0
    %1944 = vmatprep.subr.mxu0 0.0
    %1945 = vmatpush1.xpose.msra.mxu0 0.0
    %1946 = vmatprep.subr.mxu0 0.0
    %1947 = vmatpush1.xpose.msra.mxu0 0.0
    %1948 = vmatprep.subr.mxu0 0.0
    %1949 = vmatpush1.xpose.msra.mxu0 0.0
    %1950 = vmatprep.subr.mxu0 0.0
    %1951 = vmatpush1.xpose.msra.mxu0 0.0
    %1952 = vmatprep.subr.mxu0 0.0
    %1953 = vmatpush1.xpose.msra.mxu0 0.0
    %1954 = vmatprep.subr.mxu0 0.0
    %1955 = vmatpush1.xpose.msra.mxu0 0.0
    %1956 = vmatprep.subr.mxu0 0.0
    %1957 = vmatpush1.xpose.msra.mxu0 0.0
    %1958 = vmatprep.subr.mxu0 0.0
    %1959 = vmatpush1.xpose.msra.mxu0 0.0
    %1960 = vmatprep.subr.mxu0 0.0
    %1961 = vmatpush1.xpose.msra.mxu0 0.0
    %1962 = vmatprep.subr.mxu0 0.0
    %1963 = vmatpush1.xpose.msra.mxu0 0.0
    %1964 = vmatprep.subr.mxu0 0.0
    %1965 = vmatpush1.xpose.msra.mxu0 0.0
    %1966 = vmatprep.subr.mxu0 0.0
    %1967 = vmatpush1.xpose.msra.mxu0 0.0
    %1968 = vmatprep.subr.mxu0 0.0
    %1969 = vmatpush1.xpose.msra.mxu0 0.0
    %1970 = vmatprep.subr.mxu0 0.0
    %1971 = vmatpush1.xpose.msra.mxu0 0.0
    %1972 = vmatprep.mubr.f32.mxu0 0.0
    %1973 = vmatmul.mubr.f32.gmra.mrb[0].mxu0 %v1900
    %v1974 = vpop.f32.mrb[0].mxu0
    %v1975 = vadd.f32 %v473, %v1974
    %v1976 = vpop.f32.mrb[0].mxu0
    %1977 = vmatprep.mubr.f32.mxu0 0.0
    %1978 = vmatmul.mubr.f32.gmra.mrb[0].mxu0 %v1902
    %v1979 = vpop.f32.mrb[0].mxu0
    %v1980 = vadd.f32 %v473, %v1979
    %v1981 = vpop.f32.mrb[0].mxu0
    %1982 = vdwg.mxu0
    %v1983 = vsel %vm562, %v1975, -inf
    %1984 = vmax.xlane.f32.xlu0 %v1983
    %v1985 = vpop.xlane.xlu0 %1984
    %v1986 = vsel %vm562, %v1980, -inf
    %1987 = vmax.xlane.f32.xlu0 %v1986
    %v1988 = vpop.xlane.xlu0 %1987
    %v1989 = vsub.f32 %v1975, %v1985
    %v1990 = vsub.f32 %v1980, %v1988
    %v1991 = vmul.f32 %v1989, 1.442695
    %v1992 = vpow.pop %v1991
    %v1993 = vmul.f32 %v1990, 1.442695
    %v1994 = vpow.pop %v1993
    %v1995 = vsel %vm562, %v1992, 0.0
    %1996 = vadd.xlane.f32.xlu0 %v1995
    %v1997 = vpop.xlane.xlu0 %1996
    %v1998 = vsel %vm562, %v1994, 0.0
    %1999 = vadd.xlane.f32.xlu0 %v1998
    %v2000 = vpop.xlane.xlu0 %1999
    %v2001 = vrcp.pop %v1997
    %v2002 = vrcp.pop %v2000
    %v2003 = vmul.f32 %v1992, %v2001
    %v2004 = vmul.f32 %v1994, %v2002
    %2005 = vrot.lane.b32.xlu0 %v462, 32
    %v2006 = vpop.permute.xlu0 %2005
    %2007 = vrot.lane.b32.xlu0 %v467, 32
    %v2008 = vpop.permute.xlu0 %2007
    %v2012 = vsel %vm562, %v2003, 0
    %v2015 = vsel %vm562, %v2004, 0
    %2017 = vmatprep.subr.mxu0 0.0
    %2018 = vmatpush1.msra.mxu0 %v2006
    %2019 = vmatprep.subr.mxu0 0.0
    %2020 = vmatpush1.msra.mxu0 %v2008
    %2021 = vmatprep.subr.mxu0 0.0
    %2022 = vmatpush1.msra.mxu0 0.0
    %2023 = vmatprep.subr.mxu0 0.0
    %2024 = vmatpush1.msra.mxu0 0.0
    %2025 = vmatprep.subr.mxu0 0.0
    %2026 = vmatpush1.msra.mxu0 0.0
    %2027 = vmatprep.subr.mxu0 0.0
    %2028 = vmatpush1.msra.mxu0 0.0
    %2029 = vmatprep.subr.mxu0 0.0
    %2030 = vmatpush1.msra.mxu0 0.0
    %2031 = vmatprep.subr.mxu0 0.0
    %2032 = vmatpush1.msra.mxu0 0.0
    %2033 = vmatprep.subr.mxu0 0.0
    %2034 = vmatpush1.msra.mxu0 0.0
    %2035 = vmatprep.subr.mxu0 0.0
    %2036 = vmatpush1.msra.mxu0 0.0
    %2037 = vmatprep.subr.mxu0 0.0
    %2038 = vmatpush1.msra.mxu0 0.0
    %2039 = vmatprep.subr.mxu0 0.0
    %2040 = vmatpush1.msra.mxu0 0.0
    %2041 = vmatprep.subr.mxu0 0.0
    %2042 = vmatpush1.msra.mxu0 0.0
    %2043 = vmatprep.subr.mxu0 0.0
    %2044 = vmatpush1.msra.mxu0 0.0
    %2045 = vmatprep.subr.mxu0 0.0
    %2046 = vmatpush1.msra.mxu0 0.0
    %2047 = vmatprep.subr.mxu0 0.0
    %2048 = vmatpush1.msra.mxu0 0.0
    %2049 = vmatprep.subr.mxu0 0.0
    %2050 = vmatpush1.msra.mxu0 0.0
    %2051 = vmatprep.subr.mxu0 0.0
    %2052 = vmatpush1.msra.mxu0 0.0
    %2053 = vmatprep.subr.mxu0 0.0
    %2054 = vmatpush1.msra.mxu0 0.0
    %2055 = vmatprep.subr.mxu0 0.0
    %2056 = vmatpush1.msra.mxu0 0.0
    %2057 = vmatprep.subr.mxu0 0.0
    %2058 = vmatpush1.msra.mxu0 0.0
    %2059 = vmatprep.subr.mxu0 0.0
    %2060 = vmatpush1.msra.mxu0 0.0
    %2061 = vmatprep.subr.mxu0 0.0
    %2062 = vmatpush1.msra.mxu0 0.0
    %2063 = vmatprep.subr.mxu0 0.0
    %2064 = vmatpush1.msra.mxu0 0.0
    %2065 = vmatprep.subr.mxu0 0.0
    %2066 = vmatpush1.msra.mxu0 0.0
    %2067 = vmatprep.subr.mxu0 0.0
    %2068 = vmatpush1.msra.mxu0 0.0
    %2069 = vmatprep.subr.mxu0 0.0
    %2070 = vmatpush1.msra.mxu0 0.0
    %2071 = vmatprep.subr.mxu0 0.0
    %2072 = vmatpush1.msra.mxu0 0.0
    %2073 = vmatprep.subr.mxu0 0.0
    %2074 = vmatpush1.msra.mxu0 0.0
    %2075 = vmatprep.subr.mxu0 0.0
    %2076 = vmatpush1.msra.mxu0 0.0
    %2077 = vmatprep.subr.mxu0 0.0
    %2078 = vmatpush1.msra.mxu0 0.0
    %2079 = vmatprep.subr.mxu0 0.0
    %2080 = vmatpush1.msra.mxu0 0.0
    %2081 = vmatprep.mubr.f32.mxu0 0.0
    %2082 = vmatmul.mubr.f32.gmra.mrb[0].mxu0 %v2012
    %v2083 = vpop.f32.mrb[0].mxu0
    %v2084 = vadd.f32 0.0, %v2083
    %v2085 = vpop.f32.mrb[0].mxu0
    %2086 = vmatprep.mubr.f32.mxu0 0.0
    %2087 = vmatmul.mubr.f32.gmra.mrb[0].mxu0 %v2015
    %v2088 = vpop.f32.mrb[0].mxu0
    %v2089 = vadd.f32 0.0, %v2088
    %v2090 = vpop.f32.mrb[0].mxu0
    %2091 = vdwg.mxu0
    %2094 = vrot.lane.b32.xlu0 %v1684, 32
    %v2095 = vpop.permute.xlu0 %2094
    %2096 = vrot.lane.b32.xlu0 %v1689, 32
    %v2097 = vpop.permute.xlu0 %2096
    %2102 = vrot.lane.b32.xlu0 %v1884, 64
    %v2103 = vpop.permute.xlu0 %2102
    %2104 = vrot.lane.b32.xlu0 %v1889, 64
    %v2105 = vpop.permute.xlu0 %2104
    %2110 = vrot.lane.b32.xlu0 %v2084, 96
    %v2111 = vpop.permute.xlu0 %2110
    %2112 = vrot.lane.b32.xlu0 %v2089, 96
    %v2113 = vpop.permute.xlu0 %2112
    %v2116 = vsel %vm474, %v1482, %v2095
    %v2117 = vsel %vm474, %v1487, %v2097
    %v2118 = vsel %vm1294, %v2116, %v2103
    %v2119 = vsel %vm1294, %v2117, %v2105
    %v2120 = vsel %vm1297, %v2118, %v2111
    %v2121 = vsel %vm1297, %v2119, %v2113
    %v2122 = vld [vmem:[#allocation13] sm:$0xff]
    %v2123 = vld [vmem:[#allocation13 + $0x8] sm:$0xff]
    %v2124 = vld [vmem:[#allocation13 + $0x10] sm:$0xff]
    %v2125 = vld [vmem:[#allocation13 + $0x18] sm:$0xff]
    %v2126 = vld [vmem:[#allocation13 + $0x20] sm:$0xff]
    %v2127 = vld [vmem:[#allocation13 + $0x28] sm:$0xff]
    %v2128 = vld [vmem:[#allocation13 + $0x30] sm:$0xff]
    %v2129 = vld [vmem:[#allocation13 + $0x38] sm:$0xff]
    %v2130 = vld [vmem:[#allocation13 + $0x40] sm:$0xff]
    %v2131 = vld [vmem:[#allocation13 + $0x48] sm:$0xff]
    %v2132 = vld [vmem:[#allocation13 + $0x50] sm:$0xff]
    %v2133 = vld [vmem:[#allocation13 + $0x58] sm:$0xff]
    %v2134 = vld [vmem:[#allocation13 + $0x60] sm:$0xff]
    %v2135 = vld [vmem:[#allocation13 + $0x68] sm:$0xff]
    %v2136 = vld [vmem:[#allocation13 + $0x70] sm:$0xff]
    %v2137 = vld [vmem:[#allocation13 + $0x78] sm:$0xff]
    %v2138 = vld [vmem:[%s10] sm:$0x1]
    %v2140 = vlaneseq
    %v2141 = vshrl.u32 %v2140, 7
    %v2142 = vsub.s32 0, %v2141
    %v2143 = vrot.slane %v2138, %v2142
    %2145 = vmatprep.subr.mxu0 0.0
    %2146 = vmatpush1.msra.mxu0 %v2122
    %2147 = vmatprep.subr.mxu0 0.0
    %2148 = vmatpush1.msra.mxu0 %v2123
    %2149 = vmatprep.subr.mxu0 0.0
    %2150 = vmatpush1.msra.mxu0 %v2124
    %2151 = vmatprep.subr.mxu0 0.0
    %2152 = vmatpush1.msra.mxu0 %v2125
    %2153 = vmatprep.subr.mxu0 0.0
    %2154 = vmatpush1.msra.mxu0 %v2126
    %2155 = vmatprep.subr.mxu0 0.0
    %2156 = vmatpush1.msra.mxu0 %v2127
    %2157 = vmatprep.subr.mxu0 0.0
    %2158 = vmatpush1.msra.mxu0 %v2128
    %2159 = vmatprep.subr.mxu0 0.0
    %2160 = vmatpush1.msra.mxu0 %v2129
    %2161 = vmatprep.subr.mxu0 0.0
    %2162 = vmatpush1.msra.mxu0 %v2130
    %2163 = vmatprep.subr.mxu0 0.0
    %2164 = vmatpush1.msra.mxu0 %v2131
    %2165 = vmatprep.subr.mxu0 0.0
    %2166 = vmatpush1.msra.mxu0 %v2132
    %2167 = vmatprep.subr.mxu0 0.0
    %2168 = vmatpush1.msra.mxu0 %v2133
    %2169 = vmatprep.subr.mxu0 0.0
    %2170 = vmatpush1.msra.mxu0 %v2134
    %2171 = vmatprep.subr.mxu0 0.0
    %2172 = vmatpush1.msra.mxu0 %v2135
    %2173 = vmatprep.subr.mxu0 0.0
    %2174 = vmatpush1.msra.mxu0 %v2136
    %2175 = vmatprep.subr.mxu0 0.0
    %2176 = vmatpush1.msra.mxu0 %v2137
    %2177 = vmatprep.subr.mxu0 0.0
    %2178 = vmatpush1.msra.mxu0 0.0
    %2179 = vmatprep.subr.mxu0 0.0
    %2180 = vmatpush1.msra.mxu0 0.0
    %2181 = vmatprep.subr.mxu0 0.0
    %2182 = vmatpush1.msra.mxu0 0.0
    %2183 = vmatprep.subr.mxu0 0.0
    %2184 = vmatpush1.msra.mxu0 0.0
    %2185 = vmatprep.subr.mxu0 0.0
    %2186 = vmatpush1.msra.mxu0 0.0
    %2187 = vmatprep.subr.mxu0 0.0
    %2188 = vmatpush1.msra.mxu0 0.0
    %2189 = vmatprep.subr.mxu0 0.0
    %2190 = vmatpush1.msra.mxu0 0.0
    %2191 = vmatprep.subr.mxu0 0.0
    %2192 = vmatpush1.msra.mxu0 0.0
    %2193 = vmatprep.subr.mxu0 0.0
    %2194 = vmatpush1.msra.mxu0 0.0
    %2195 = vmatprep.subr.mxu0 0.0
    %2196 = vmatpush1.msra.mxu0 0.0
    %2197 = vmatprep.subr.mxu0 0.0
    %2198 = vmatpush1.msra.mxu0 0.0
    %2199 = vmatprep.subr.mxu0 0.0
    %2200 = vmatpush1.msra.mxu0 0.0
    %2201 = vmatprep.subr.mxu0 0.0
    %2202 = vmatpush1.msra.mxu0 0.0
    %2203 = vmatprep.subr.mxu0 0.0
    %2204 = vmatpush1.msra.mxu0 0.0
    %2205 = vmatprep.subr.mxu0 0.0
    %2206 = vmatpush1.msra.mxu0 0.0
    %2207 = vmatprep.subr.mxu0 0.0
    %2208 = vmatpush1.msra.mxu0 0.0
    %2209 = vmatprep.mubr.f32.mxu0 0.0
    %2210 = vmatmul.mubr.f32.gmra.mrb[0].mxu0 %v1298
    %v2211 = vpop.f32.mrb[0].mxu0
    %v2212 = vadd.f32 %v2143, %v2211
    %v2213 = vpop.f32.mrb[0].mxu0
    %2214 = vmatprep.mubr.f32.mxu0 0.0
    %2215 = vmatmul.mubr.f32.gmra.mrb[0].mxu0 %v1299
    %v2216 = vpop.f32.mrb[0].mxu0
    %v2217 = vadd.f32 %v2143, %v2216
    %v2218 = vpop.f32.mrb[0].mxu0
    %2219 = vmatprep.mubr.f32.mxu0 0.0
    %2220 = vmatmul.mubr.f32.gmra.mrb[0].mxu0 %v2120
    %v2221 = vpop.f32.mrb[0].mxu0
    %v2222 = vadd.f32 %v2143, %v2221
    %v2223 = vpop.f32.mrb[0].mxu0
    %2224 = vmatprep.mubr.f32.mxu0 0.0
    %2225 = vmatmul.mubr.f32.gmra.mrb[0].mxu0 %v2121
    %v2226 = vpop.f32.mrb[0].mxu0
    %v2227 = vadd.f32 %v2143, %v2226
    %v2228 = vpop.f32.mrb[0].mxu0
    %2229 = vdwg.mxu0
    %2230 = vst [vmem:[#allocation14] sm:$0xff] %v2212
    %2231 = vst [vmem:[#allocation14 + $0x8] sm:$0xff] %v2217
    %2232 = vst [vmem:[#allocation14 + $0x10] sm:$0xff] %v2222
    %2233 = vst [vmem:[#allocation14 + $0x18] sm:$0xff] %v2227
    // Predicated region
    $region74: #{tpu_custom_call.1} parent=1 // pred_check
      _
    $region75: #{tpu_custom_call.1} parent=1 // pred_check_branch
      %2235 = sbr.rel (0) target = $region77
    $region76: #{tpu_custom_call.1} parent=1 // pred_region
      %s2237 = ssub.s32 512, 512
      %2238 = vsyncadd [#allocation4], %s2237
      %s2239 = sshll.u32 [#allocation14], 4
      %s2240 = int_to_ptr.vmem [resolvable:$true] %s2239
      %2245 = dma.vmem_to_hbm [thread:$0]  %s2240, 512, %s11, [#allocation4], 128, 128, 8
    $region77: #{tpu_custom_call.1} parent=1 // pred_fallthru
      _
    // Predicated region
    $region78: #{tpu_custom_call.1} parent=1 // pred_check
      _
    $region79: #{tpu_custom_call.1} parent=1 // pred_check_branch
      %2247 = sbr.rel (0) target = $region81
    $region80: #{tpu_custom_call.1} parent=1 // pred_region
      %2248 = dma.done [#allocation4], 512
    $region81: #{tpu_custom_call.1} parent=1 // pred_fallthru
      _
    %2249 = vsyncpa [#allocation3], 1
    %2250 = vsyncpa [#allocation6], 1
    %2251 = vsyncpa [#allocation9], 1
    %2252 = vsyncpa [#allocation12], 1
    %2253 = vsyncpa [#allocation4], 1

</llo_original>
